<compile_context>
chip_gen: v7x
topology: tpu7x:2x2x1
jax: 0.10.0
libtpu: 0.0.40
codegen_flags: <defaults>
</compile_context>

<pallas_src>
import functools

import jax
import jax.numpy as jnp
import numpy as np
from jax import lax
from jax.experimental import pallas as pl
from jax.experimental.pallas import tpu as pltpu

EPS = 1e-5


def _vmem_limit_bytes():
    """Generation-aware VMEM budget: ~3/4 of physical, capped at 100 MiB."""
    try:
        cap = pltpu.get_tpu_info().vmem_capacity_bytes
        return int(min(cap * 3 // 4, 100 * 1024 * 1024))
    except Exception:  # conservative fallback if the query is unavailable
        return 64 * 1024 * 1024


def _conv_slab(x_ref, w_ref, slab_ref, *, k, wp, cin, mw):
    """Stride-1 conv of one image as a single MXU matmul.

    x_ref    : (1, Cin, L) bf16   width-flattened, zero-padded input
    w_ref    : (Cout, k*k*Cin) bf16
    slab_ref : (k*k*Cin, Mw) bf16 VMEM scratch
    returns  : (Cout, Mw) f32 'wide' conv output (garbage where wo >= Wout)
    """
    for kh in range(k):
        for kw in range(k):
            shift = kh * wp + kw
            r0 = (kh * k + kw) * cin
            slab_ref[r0:r0 + cin, :] = x_ref[0, :, shift:shift + mw]
    return jnp.dot(w_ref[...], slab_ref[...], preferred_element_type=jnp.float32)


def _stats_kernel(x_ref, w_ref, mask_ref, stats_ref, slab_ref, *, k, wp, cin, mw):
    # Pass 1: conv + per-image per-channel partial sum / sum-of-squares.
    y = _conv_slab(x_ref, w_ref, slab_ref, k=k, wp=wp, cin=cin, mw=mw)
    ym = y * mask_ref[...]                         # zero out garbage wide columns
    s1 = jnp.sum(ym, axis=1, keepdims=True)        # (Cout, 1)
    s2 = jnp.sum(ym * ym, axis=1, keepdims=True)   # (Cout, 1)
    stats_ref[0] = jnp.concatenate([s1, s2], axis=1)   # (Cout, 2)


def _apply_kernel(x_ref, w_ref, params_ref, out_ref, slab_ref,
                  *, k, wp, wout, hout, cin, mw):
    # Pass 2: conv + folded BN affine + PReLU; store only the valid columns.
    y = _conv_slab(x_ref, w_ref, slab_ref, k=k, wp=wp, cin=cin, mw=mw)
    scale = params_ref[:, 0:1]
    bias = params_ref[:, 1:2]
    alpha = params_ref[:, 2:3]
    z = y * scale + bias
    z = jnp.where(z >= 0.0, z, alpha * z).astype(out_ref.dtype)
    # In-kernel width un-pad: write the valid Wout columns of each output row
    # into the dense (Cout, Hout*Wout) output block (no wrapper-side HBM pass).
    for ho in range(hout):
        out_ref[0, :, ho * wout:(ho + 1) * wout] = z[:, ho * wp:ho * wp + wout]


@functools.partial(jax.jit, static_argnames=("k", "s", "p", "linear", "out_dtype"))
def conv_block_forward(x, weight, gamma, beta, prelu_alpha, *, k, s, p,
                       linear=False, out_dtype=jnp.float32):
    # TODO(synk): depthwise/grouped conv (dw=True), stride > 1, BatchNorm
    # running_mean/var side-effect updates, v7x spatial row-tiling with halo,
    # and the store-y (non-recompute) pass-2 variant for large Cin are not
    # implemented on this fused stride-1 path.
    if s != 1:
        raise NotImplementedError("fused ConvBlock kernel currently supports stride 1")

    N, Cin, H, W = x.shape
    Cout = weight.shape[0]
    Hp, Wp = H + 2 * p, W + 2 * p
    Hout, Wout = Hp - k + 1, Wp - k + 1
    KC = k * k * Cin

    Mw = Hout * Wp                                   # valid wide lane extent
    Mw_pad = ((Mw + 127) // 128) * 128               # lane-dense matmul N dim
    need_l = (k - 1) * Wp + (k - 1) + Mw_pad         # lanes the last tap reads
    rows_extra = max((need_l - Hp * Wp + Wp - 1) // Wp, 0)
    Hp_ext = Hp + rows_extra
    L = Hp_ext * Wp

    # Single prep pass over x: bf16 cast first (half the pad bytes), then one
    # pad providing the spatial halo AND the flat-lane overhang (extra rows).
    x_pad = jnp.pad(x.astype(jnp.bfloat16),
                    ((0, 0), (0, 0), (p, p + rows_extra), (p, p)))
    x_flat = x_pad.reshape(N, Cin, L)

    # Weights as (Cout, k*k*Cin) bf16 with column order (kh, kw, cin) matching
    # the slab row order.
    w2 = weight.transpose(0, 2, 3, 1).reshape(Cout, KC).astype(jnp.bfloat16)

    # Validity mask for the wide layout (zero where wo >= Wout or lane >= Mw).
    # Kept as a tiny grid-invariant input (fetched once); avoids relying on
    # non-power-of-2 lane modulo lowering inside the kernel.
    col = np.arange(Mw_pad, dtype=np.int32)
    mask_np = ((col % Wp < Wout) & (col < Mw)).astype(np.float32).reshape(1, Mw_pad)
    mask = jnp.asarray(mask_np)

    cparams = pltpu.CompilerParams(
        dimension_semantics=("parallel",),
        vmem_limit_bytes=_vmem_limit_bytes(),
    )
    slab = pltpu.VMEM((KC, Mw_pad), jnp.bfloat16)

    # ---- pass 1: per-image partial statistics -------------------------------
    stats = pl.pallas_call(
        functools.partial(_stats_kernel, k=k, wp=Wp, cin=Cin, mw=Mw_pad),
        out_shape=jax.ShapeDtypeStruct((N, Cout, 2), jnp.float32),
        grid=(N,),
        in_specs=[
            pl.BlockSpec((1, Cin, L), lambda n: (n, 0, 0)),
            pl.BlockSpec((Cout, KC), lambda n: (0, 0)),
            pl.BlockSpec((1, Mw_pad), lambda n: (0, 0)),
        ],
        out_specs=pl.BlockSpec((1, Cout, 2), lambda n: (n, 0, 0)),
        scratch_shapes=[slab],
        compiler_params=cparams,
    )(x_flat, w2, mask)

    # ---- tiny cross-image reduction + BN affine folding (wrapper side) ------
    totals = jnp.sum(stats, axis=0)                        # (Cout, 2)
    m_valid = float(N * Hout * Wout)
    mean = totals[:, 0] / m_valid
    var = jnp.maximum(totals[:, 1] / m_valid - mean * mean, 0.0)   # biased var
    inv_std = lax.rsqrt(var + EPS)
    scale = gamma.astype(jnp.float32) * inv_std
    bias = beta.astype(jnp.float32) - mean * scale
    if linear:
        alpha = jnp.ones((Cout,), jnp.float32)             # PReLU slope 1 == identity
    else:
        alpha = prelu_alpha.astype(jnp.float32).reshape(Cout)
    params = jnp.stack([scale, bias, alpha], axis=1)       # (Cout, 3)

    # ---- pass 2: conv + folded BN + PReLU, dense valid-only output ----------
    y = pl.pallas_call(
        functools.partial(_apply_kernel, k=k, wp=Wp, wout=Wout, hout=Hout,
                          cin=Cin, mw=Mw_pad),
        out_shape=jax.ShapeDtypeStruct((N, Cout, Hout * Wout), out_dtype),
        grid=(N,),
        in_specs=[
            pl.BlockSpec((1, Cin, L), lambda n: (n, 0, 0)),
            pl.BlockSpec((Cout, KC), lambda n: (0, 0)),
            pl.BlockSpec((Cout, 3), lambda n: (0, 0)),
        ],
        out_specs=pl.BlockSpec((1, Cout, Hout * Wout), lambda n: (n, 0, 0)),
        scratch_shapes=[slab],
        compiler_params=cparams,
    )(x_flat, w2, params)

    # Metadata-only reshape to NCHW (the width un-pad already happened inside
    # the kernel stores, so no extra HBM pass here).
    return y.reshape(N, Cout, Hout, Wout)


if __name__ == "__main__":
    # ConvBlock(inp=4, oup=8, k=3, s=1, p=1, dw=False, linear=False)
    N, Cin, H, W = 2, 4, 16, 16
    Cout, k, s, p = 8, 3, 1, 1

    key = jax.random.PRNGKey(0)
    kx, kw, kg, kb = jax.random.split(key, 4)

    x = jax.random.normal(kx, (N, Cin, H, W), jnp.float32)
    weight = jax.random.normal(kw, (Cout, Cin, k, k), jnp.float32) * 0.1
    gamma = 1.0 + 0.1 * jax.random.normal(kg, (Cout,), jnp.float32)   # bn.weight
    beta = 0.1 * jax.random.normal(kb, (Cout,), jnp.float32)          # bn.bias
    prelu_alpha = jnp.full((Cout,), 0.25, jnp.float32)                # PReLU init

    out = conv_block_forward(x, weight, gamma, beta, prelu_alpha,
                             k=k, s=s, p=p, linear=False)
    out = jax.block_until_ready(out)
    assert out.shape == (N, Cout, H, W)

    # Reference (plain XLA ops, same bf16-rounded conv operands).
    xb = x.astype(jnp.bfloat16).astype(jnp.float32)
    wb = weight.astype(jnp.bfloat16).astype(jnp.float32)
    yref = lax.conv_general_dilated(xb, wb, (s, s), [(p, p), (p, p)],
                                    dimension_numbers=("NCHW", "OIHW", "NCHW"))
    mean = yref.mean(axis=(0, 2, 3), keepdims=True)
    var = yref.var(axis=(0, 2, 3), keepdims=True)
    z = (yref - mean) * lax.rsqrt(var + EPS) * gamma.reshape(1, -1, 1, 1) \
        + beta.reshape(1, -1, 1, 1)
    ref = jnp.where(z >= 0.0, z, prelu_alpha.reshape(1, -1, 1, 1) * z)
    assert jnp.allclose(out, ref, atol=3e-2, rtol=3e-2), \
        float(jnp.max(jnp.abs(out - ref)))

    print("KERNEL_OK")
</pallas_src>

<mosaic_0001>
module attributes {stable_mosaic.version = 11 : i64} {
  func.func @_stats_kernel(%arg0: i32, %arg1: memref<1x4x432xbf16, #tpu.memory_space<vmem>>, %arg2: memref<8x36xbf16, #tpu.memory_space<vmem>>, %arg3: memref<1x384xf32, #tpu.memory_space<vmem>>, %arg4: memref<1x8x2xf32, #tpu.memory_space<vmem>>, %arg5: memref<36x384xbf16, #tpu.memory_space<vmem>>) attributes {dimension_semantics = [#tpu.dimension_semantics<parallel>], iteration_bounds = array<i64: 2>, scalar_prefetch = 0 : i64, scratch_operands = 1 : i64, tpu.core_type = #tpu.core_type<tc>, window_params = [{transform_indices = @transform_0, window_bounds = array<i64: 1, 4, 432>}, {pipeline_mode = #tpu.pipeline_mode<synchronous>, transform_indices = @transform_1, window_bounds = array<i64: 8, 36>}, {pipeline_mode = #tpu.pipeline_mode<synchronous>, transform_indices = @transform_2, window_bounds = array<i64: 1, 384>}, {transform_indices = @transform_3, window_bounds = array<i64: 1, 8, 2>}]} {
    %c0 = arith.constant 0 : index
    %c0_0 = arith.constant 0 : index
    %c0_1 = arith.constant 0 : index
    %0 = vector.load %arg1[%c0, %c0_0, %c0_1] : memref<1x4x432xbf16, #tpu.memory_space<vmem>>, vector<1x4x384xbf16>
    %1 = vector.shape_cast %0 : vector<1x4x384xbf16> to vector<4x384xbf16>
    %c0_2 = arith.constant 0 : index
    %c0_3 = arith.constant 0 : index
    %2 = vector.load %arg5[%c0_2, %c0_3] : memref<36x384xbf16, #tpu.memory_space<vmem>>, vector<4x384xbf16>
    tpu.vector_store %arg5[%c0_2, %c0_3], %1 {strides = array<i32>} : memref<36x384xbf16, #tpu.memory_space<vmem>>, vector<4x384xbf16>,
    %c0_4 = arith.constant 0 : index
    %c0_5 = arith.constant 0 : index
    %c1 = arith.constant 1 : index
    %3 = vector.load %arg1[%c0_4, %c0_5, %c1] : memref<1x4x432xbf16, #tpu.memory_space<vmem>>, vector<1x4x384xbf16>
    %4 = vector.shape_cast %3 : vector<1x4x384xbf16> to vector<4x384xbf16>
    %c4 = arith.constant 4 : index
    %c0_6 = arith.constant 0 : index
    %5 = vector.load %arg5[%c4, %c0_6] : memref<36x384xbf16, #tpu.memory_space<vmem>>, vector<4x384xbf16>
    tpu.vector_store %arg5[%c4, %c0_6], %4 {strides = array<i32>} : memref<36x384xbf16, #tpu.memory_space<vmem>>, vector<4x384xbf16>,
    %c0_7 = arith.constant 0 : index
    %c0_8 = arith.constant 0 : index
    %c2 = arith.constant 2 : index
    %6 = vector.load %arg1[%c0_7, %c0_8, %c2] : memref<1x4x432xbf16, #tpu.memory_space<vmem>>, vector<1x4x384xbf16>
    %7 = vector.shape_cast %6 : vector<1x4x384xbf16> to vector<4x384xbf16>
    %c8 = arith.constant 8 : index
    %c0_9 = arith.constant 0 : index
    %8 = vector.load %arg5[%c8, %c0_9] : memref<36x384xbf16, #tpu.memory_space<vmem>>, vector<4x384xbf16>
    tpu.vector_store %arg5[%c8, %c0_9], %7 {strides = array<i32>} : memref<36x384xbf16, #tpu.memory_space<vmem>>, vector<4x384xbf16>,
    %c0_10 = arith.constant 0 : index
    %c0_11 = arith.constant 0 : index
    %c18 = arith.constant 18 : index
    %9 = vector.load %arg1[%c0_10, %c0_11, %c18] : memref<1x4x432xbf16, #tpu.memory_space<vmem>>, vector<1x4x384xbf16>
    %10 = vector.shape_cast %9 : vector<1x4x384xbf16> to vector<4x384xbf16>
    %c12 = arith.constant 12 : index
    %c0_12 = arith.constant 0 : index
    %11 = vector.load %arg5[%c12, %c0_12] : memref<36x384xbf16, #tpu.memory_space<vmem>>, vector<4x384xbf16>
    tpu.vector_store %arg5[%c12, %c0_12], %10 {strides = array<i32>} : memref<36x384xbf16, #tpu.memory_space<vmem>>, vector<4x384xbf16>,
    %c0_13 = arith.constant 0 : index
    %c0_14 = arith.constant 0 : index
    %c19 = arith.constant 19 : index
    %12 = vector.load %arg1[%c0_13, %c0_14, %c19] : memref<1x4x432xbf16, #tpu.memory_space<vmem>>, vector<1x4x384xbf16>
    %13 = vector.shape_cast %12 : vector<1x4x384xbf16> to vector<4x384xbf16>
    %c16 = arith.constant 16 : index
    %c0_15 = arith.constant 0 : index
    %14 = vector.load %arg5[%c16, %c0_15] : memref<36x384xbf16, #tpu.memory_space<vmem>>, vector<4x384xbf16>
    tpu.vector_store %arg5[%c16, %c0_15], %13 {strides = array<i32>} : memref<36x384xbf16, #tpu.memory_space<vmem>>, vector<4x384xbf16>,
    %c0_16 = arith.constant 0 : index
    %c0_17 = arith.constant 0 : index
    %c20 = arith.constant 20 : index
    %15 = vector.load %arg1[%c0_16, %c0_17, %c20] : memref<1x4x432xbf16, #tpu.memory_space<vmem>>, vector<1x4x384xbf16>
    %16 = vector.shape_cast %15 : vector<1x4x384xbf16> to vector<4x384xbf16>
    %c20_18 = arith.constant 20 : index
    %c0_19 = arith.constant 0 : index
    %17 = vector.load %arg5[%c20_18, %c0_19] : memref<36x384xbf16, #tpu.memory_space<vmem>>, vector<4x384xbf16>
    tpu.vector_store %arg5[%c20_18, %c0_19], %16 {strides = array<i32>} : memref<36x384xbf16, #tpu.memory_space<vmem>>, vector<4x384xbf16>,
    %c0_20 = arith.constant 0 : index
    %c0_21 = arith.constant 0 : index
    %c36 = arith.constant 36 : index
    %18 = vector.load %arg1[%c0_20, %c0_21, %c36] : memref<1x4x432xbf16, #tpu.memory_space<vmem>>, vector<1x4x384xbf16>
    %19 = vector.shape_cast %18 : vector<1x4x384xbf16> to vector<4x384xbf16>
    %c24 = arith.constant 24 : index
    %c0_22 = arith.constant 0 : index
    %20 = vector.load %arg5[%c24, %c0_22] : memref<36x384xbf16, #tpu.memory_space<vmem>>, vector<4x384xbf16>
    tpu.vector_store %arg5[%c24, %c0_22], %19 {strides = array<i32>} : memref<36x384xbf16, #tpu.memory_space<vmem>>, vector<4x384xbf16>,
    %c0_23 = arith.constant 0 : index
    %c0_24 = arith.constant 0 : index
    %c37 = arith.constant 37 : index
    %21 = vector.load %arg1[%c0_23, %c0_24, %c37] : memref<1x4x432xbf16, #tpu.memory_space<vmem>>, vector<1x4x384xbf16>
    %22 = vector.shape_cast %21 : vector<1x4x384xbf16> to vector<4x384xbf16>
    %c28 = arith.constant 28 : index
    %c0_25 = arith.constant 0 : index
    %23 = vector.load %arg5[%c28, %c0_25] : memref<36x384xbf16, #tpu.memory_space<vmem>>, vector<4x384xbf16>
    tpu.vector_store %arg5[%c28, %c0_25], %22 {strides = array<i32>} : memref<36x384xbf16, #tpu.memory_space<vmem>>, vector<4x384xbf16>,
    %c0_26 = arith.constant 0 : index
    %c0_27 = arith.constant 0 : index
    %c38 = arith.constant 38 : index
    %24 = vector.load %arg1[%c0_26, %c0_27, %c38] : memref<1x4x432xbf16, #tpu.memory_space<vmem>>, vector<1x4x384xbf16>
    %25 = vector.shape_cast %24 : vector<1x4x384xbf16> to vector<4x384xbf16>
    %c32 = arith.constant 32 : index
    %c0_28 = arith.constant 0 : index
    %26 = vector.load %arg5[%c32, %c0_28] : memref<36x384xbf16, #tpu.memory_space<vmem>>, vector<4x384xbf16>
    tpu.vector_store %arg5[%c32, %c0_28], %25 {strides = array<i32>} : memref<36x384xbf16, #tpu.memory_space<vmem>>, vector<4x384xbf16>,
    %c0_29 = arith.constant 0 : index
    %c0_30 = arith.constant 0 : index
    %27 = vector.load %arg2[%c0_29, %c0_30] : memref<8x36xbf16, #tpu.memory_space<vmem>>, vector<8x36xbf16>
    %c0_31 = arith.constant 0 : index
    %c0_32 = arith.constant 0 : index
    %28 = vector.load %arg5[%c0_31, %c0_32] : memref<36x384xbf16, #tpu.memory_space<vmem>>, vector<36x384xbf16>
    %cst = arith.constant dense<0.000000e+00> : vector<8x384xf32>
    %29 = tpu.matmul %27, %28, %cst {dimension_numbers = #tpu.dot_dimension_numbers<[1], [0], [0], [1], [0, 0, 1, 1], [], []>} : vector<8x36xbf16>, vector<36x384xbf16>, vector<8x384xf32> -> vector<8x384xf32>
    %c0_33 = arith.constant 0 : index
    %c0_34 = arith.constant 0 : index
    %30 = vector.load %arg3[%c0_33, %c0_34] : memref<1x384xf32, #tpu.memory_space<vmem>>, vector<1x384xf32>
    %31 = vector.broadcast %30 : vector<1x384xf32> to vector<8x384xf32>
    %32 = arith.mulf %29, %31 : vector<8x384xf32>
    %cst_35 = arith.constant dense<0.000000e+00> : vector<8xf32>
    %33 = vector.multi_reduction <add>, %32, %cst_35 [1] : vector<8x384xf32> to vector<8xf32>
    %34 = vector.shape_cast %33 : vector<8xf32> to vector<8x1xf32>
    %35 = arith.mulf %32, %32 : vector<8x384xf32>
    %cst_36 = arith.constant dense<0.000000e+00> : vector<8xf32>
    %36 = vector.multi_reduction <add>, %35, %cst_36 [1] : vector<8x384xf32> to vector<8xf32>
    %37 = vector.shape_cast %36 : vector<8xf32> to vector<8x1xf32>
    %38 = tpu.concatenate %34, %37 in 1 : vector<8x1xf32>, vector<8x1xf32> -> vector<8x2xf32>
    %c0_37 = arith.constant 0 : index
    %c0_38 = arith.constant 0 : index
    %c0_39 = arith.constant 0 : index
    %39 = vector.load %arg4[%c0_37, %c0_38, %c0_39] : memref<1x8x2xf32, #tpu.memory_space<vmem>>, vector<1x8x2xf32>
    %40 = vector.shape_cast %39 : vector<1x8x2xf32> to vector<8x2xf32>
    %41 = vector.shape_cast %38 : vector<8x2xf32> to vector<1x8x2xf32>
    tpu.vector_store %arg4[%c0_37, %c0_38, %c0_39], %41 {strides = array<i32>} : memref<1x8x2xf32, #tpu.memory_space<vmem>>, vector<1x8x2xf32>,
    return
  }
  func.func @transform_0(%arg0: i32) -> (i32, i32, i32) {
    %c0_i32 = arith.constant 0 : i32
    %c0_i32_0 = arith.constant 0 : i32
    %c0_i32_1 = arith.constant 0 : i32
    return %arg0, %c0_i32, %c0_i32_0 : i32, i32, i32
  }
  func.func @transform_1(%arg0: i32) -> (i32, i32) {
    %c0_i32 = arith.constant 0 : i32
    %c0_i32_0 = arith.constant 0 : i32
    %c0_i32_1 = arith.constant 0 : i32
    return %c0_i32, %c0_i32_0 : i32, i32
  }
  func.func @transform_2(%arg0: i32) -> (i32, i32) {
    %c0_i32 = arith.constant 0 : i32
    %c0_i32_0 = arith.constant 0 : i32
    %c0_i32_1 = arith.constant 0 : i32
    return %c0_i32, %c0_i32_0 : i32, i32
  }
  func.func @transform_3(%arg0: i32) -> (i32, i32, i32) {
    %c0_i32 = arith.constant 0 : i32
    %c0_i32_0 = arith.constant 0 : i32
    %c0_i32_1 = arith.constant 0 : i32
    return %arg0, %c0_i32, %c0_i32_0 : i32, i32, i32
  }
}

module attributes {stable_mosaic.version = 11 : i64} {
  func.func @_apply_kernel(%arg0: i32, %arg1: memref<1x4x432xbf16, #tpu.memory_space<vmem>>, %arg2: memref<8x36xbf16, #tpu.memory_space<vmem>>, %arg3: memref<8x3xf32, #tpu.memory_space<vmem>>, %arg4: memref<1x8x256xf32, #tpu.memory_space<vmem>>, %arg5: memref<36x384xbf16, #tpu.memory_space<vmem>>) attributes {dimension_semantics = [#tpu.dimension_semantics<parallel>], iteration_bounds = array<i64: 2>, scalar_prefetch = 0 : i64, scratch_operands = 1 : i64, tpu.core_type = #tpu.core_type<tc>, window_params = [{transform_indices = @transform_0, window_bounds = array<i64: 1, 4, 432>}, {pipeline_mode = #tpu.pipeline_mode<synchronous>, transform_indices = @transform_1, window_bounds = array<i64: 8, 36>}, {pipeline_mode = #tpu.pipeline_mode<synchronous>, transform_indices = @transform_2, window_bounds = array<i64: 8, 3>}, {transform_indices = @transform_3, window_bounds = array<i64: 1, 8, 256>}]} {
    %c0 = arith.constant 0 : index
    %c0_0 = arith.constant 0 : index
    %c0_1 = arith.constant 0 : index
    %0 = vector.load %arg1[%c0, %c0_0, %c0_1] : memref<1x4x432xbf16, #tpu.memory_space<vmem>>, vector<1x4x384xbf16>
    %1 = vector.shape_cast %0 : vector<1x4x384xbf16> to vector<4x384xbf16>
    %c0_2 = arith.constant 0 : index
    %c0_3 = arith.constant 0 : index
    %2 = vector.load %arg5[%c0_2, %c0_3] : memref<36x384xbf16, #tpu.memory_space<vmem>>, vector<4x384xbf16>
    tpu.vector_store %arg5[%c0_2, %c0_3], %1 {strides = array<i32>} : memref<36x384xbf16, #tpu.memory_space<vmem>>, vector<4x384xbf16>,
    %c0_4 = arith.constant 0 : index
    %c0_5 = arith.constant 0 : index
    %c1 = arith.constant 1 : index
    %3 = vector.load %arg1[%c0_4, %c0_5, %c1] : memref<1x4x432xbf16, #tpu.memory_space<vmem>>, vector<1x4x384xbf16>
    %4 = vector.shape_cast %3 : vector<1x4x384xbf16> to vector<4x384xbf16>
    %c4 = arith.constant 4 : index
    %c0_6 = arith.constant 0 : index
    %5 = vector.load %arg5[%c4, %c0_6] : memref<36x384xbf16, #tpu.memory_space<vmem>>, vector<4x384xbf16>
    tpu.vector_store %arg5[%c4, %c0_6], %4 {strides = array<i32>} : memref<36x384xbf16, #tpu.memory_space<vmem>>, vector<4x384xbf16>,
    %c0_7 = arith.constant 0 : index
    %c0_8 = arith.constant 0 : index
    %c2 = arith.constant 2 : index
    %6 = vector.load %arg1[%c0_7, %c0_8, %c2] : memref<1x4x432xbf16, #tpu.memory_space<vmem>>, vector<1x4x384xbf16>
    %7 = vector.shape_cast %6 : vector<1x4x384xbf16> to vector<4x384xbf16>
    %c8 = arith.constant 8 : index
    %c0_9 = arith.constant 0 : index
    %8 = vector.load %arg5[%c8, %c0_9] : memref<36x384xbf16, #tpu.memory_space<vmem>>, vector<4x384xbf16>
    tpu.vector_store %arg5[%c8, %c0_9], %7 {strides = array<i32>} : memref<36x384xbf16, #tpu.memory_space<vmem>>, vector<4x384xbf16>,
    %c0_10 = arith.constant 0 : index
    %c0_11 = arith.constant 0 : index
    %c18 = arith.constant 18 : index
    %9 = vector.load %arg1[%c0_10, %c0_11, %c18] : memref<1x4x432xbf16, #tpu.memory_space<vmem>>, vector<1x4x384xbf16>
    %10 = vector.shape_cast %9 : vector<1x4x384xbf16> to vector<4x384xbf16>
    %c12 = arith.constant 12 : index
    %c0_12 = arith.constant 0 : index
    %11 = vector.load %arg5[%c12, %c0_12] : memref<36x384xbf16, #tpu.memory_space<vmem>>, vector<4x384xbf16>
    tpu.vector_store %arg5[%c12, %c0_12], %10 {strides = array<i32>} : memref<36x384xbf16, #tpu.memory_space<vmem>>, vector<4x384xbf16>,
    %c0_13 = arith.constant 0 : index
    %c0_14 = arith.constant 0 : index
    %c19 = arith.constant 19 : index
    %12 = vector.load %arg1[%c0_13, %c0_14, %c19] : memref<1x4x432xbf16, #tpu.memory_space<vmem>>, vector<1x4x384xbf16>
    %13 = vector.shape_cast %12 : vector<1x4x384xbf16> to vector<4x384xbf16>
    %c16 = arith.constant 16 : index
    %c0_15 = arith.constant 0 : index
    %14 = vector.load %arg5[%c16, %c0_15] : memref<36x384xbf16, #tpu.memory_space<vmem>>, vector<4x384xbf16>
    tpu.vector_store %arg5[%c16, %c0_15], %13 {strides = array<i32>} : memref<36x384xbf16, #tpu.memory_space<vmem>>, vector<4x384xbf16>,
    %c0_16 = arith.constant 0 : index
    %c0_17 = arith.constant 0 : index
    %c20 = arith.constant 20 : index
    %15 = vector.load %arg1[%c0_16, %c0_17, %c20] : memref<1x4x432xbf16, #tpu.memory_space<vmem>>, vector<1x4x384xbf16>
    %16 = vector.shape_cast %15 : vector<1x4x384xbf16> to vector<4x384xbf16>
    %c20_18 = arith.constant 20 : index
    %c0_19 = arith.constant 0 : index
    %17 = vector.load %arg5[%c20_18, %c0_19] : memref<36x384xbf16, #tpu.memory_space<vmem>>, vector<4x384xbf16>
    tpu.vector_store %arg5[%c20_18, %c0_19], %16 {strides = array<i32>} : memref<36x384xbf16, #tpu.memory_space<vmem>>, vector<4x384xbf16>,
    %c0_20 = arith.constant 0 : index
    %c0_21 = arith.constant 0 : index
    %c36 = arith.constant 36 : index
    %18 = vector.load %arg1[%c0_20, %c0_21, %c36] : memref<1x4x432xbf16, #tpu.memory_space<vmem>>, vector<1x4x384xbf16>
    %19 = vector.shape_cast %18 : vector<1x4x384xbf16> to vector<4x384xbf16>
    %c24 = arith.constant 24 : index
    %c0_22 = arith.constant 0 : index
    %20 = vector.load %arg5[%c24, %c0_22] : memref<36x384xbf16, #tpu.memory_space<vmem>>, vector<4x384xbf16>
    tpu.vector_store %arg5[%c24, %c0_22], %19 {strides = array<i32>} : memref<36x384xbf16, #tpu.memory_space<vmem>>, vector<4x384xbf16>,
    %c0_23 = arith.constant 0 : index
    %c0_24 = arith.constant 0 : index
    %c37 = arith.constant 37 : index
    %21 = vector.load %arg1[%c0_23, %c0_24, %c37] : memref<1x4x432xbf16, #tpu.memory_space<vmem>>, vector<1x4x384xbf16>
    %22 = vector.shape_cast %21 : vector<1x4x384xbf16> to vector<4x384xbf16>
    %c28 = arith.constant 28 : index
    %c0_25 = arith.constant 0 : index
    %23 = vector.load %arg5[%c28, %c0_25] : memref<36x384xbf16, #tpu.memory_space<vmem>>, vector<4x384xbf16>
    tpu.vector_store %arg5[%c28, %c0_25], %22 {strides = array<i32>} : memref<36x384xbf16, #tpu.memory_space<vmem>>, vector<4x384xbf16>,
    %c0_26 = arith.constant 0 : index
    %c0_27 = arith.constant 0 : index
    %c38 = arith.constant 38 : index
    %24 = vector.load %arg1[%c0_26, %c0_27, %c38] : memref<1x4x432xbf16, #tpu.memory_space<vmem>>, vector<1x4x384xbf16>
    %25 = vector.shape_cast %24 : vector<1x4x384xbf16> to vector<4x384xbf16>
    %c32 = arith.constant 32 : index
    %c0_28 = arith.constant 0 : index
    %26 = vector.load %arg5[%c32, %c0_28] : memref<36x384xbf16, #tpu.memory_space<vmem>>, vector<4x384xbf16>
    tpu.vector_store %arg5[%c32, %c0_28], %25 {strides = array<i32>} : memref<36x384xbf16, #tpu.memory_space<vmem>>, vector<4x384xbf16>,
    %c0_29 = arith.constant 0 : index
    %c0_30 = arith.constant 0 : index
    %27 = vector.load %arg2[%c0_29, %c0_30] : memref<8x36xbf16, #tpu.memory_space<vmem>>, vector<8x36xbf16>
    %c0_31 = arith.constant 0 : index
    %c0_32 = arith.constant 0 : index
    %28 = vector.load %arg5[%c0_31, %c0_32] : memref<36x384xbf16, #tpu.memory_space<vmem>>, vector<36x384xbf16>
    %cst = arith.constant dense<0.000000e+00> : vector<8x384xf32>
    %29 = tpu.matmul %27, %28, %cst {dimension_numbers = #tpu.dot_dimension_numbers<[1], [0], [0], [1], [0, 0, 1, 1], [], []>} : vector<8x36xbf16>, vector<36x384xbf16>, vector<8x384xf32> -> vector<8x384xf32>
    %c0_33 = arith.constant 0 : index
    %c0_34 = arith.constant 0 : index
    %30 = vector.load %arg3[%c0_33, %c0_34] : memref<8x3xf32, #tpu.memory_space<vmem>>, vector<8x1xf32>
    %c0_35 = arith.constant 0 : index
    %c1_36 = arith.constant 1 : index
    %31 = vector.load %arg3[%c0_35, %c1_36] : memref<8x3xf32, #tpu.memory_space<vmem>>, vector<8x1xf32>
    %c0_37 = arith.constant 0 : index
    %c2_38 = arith.constant 2 : index
    %32 = vector.load %arg3[%c0_37, %c2_38] : memref<8x3xf32, #tpu.memory_space<vmem>>, vector<8x1xf32>
    %33 = vector.broadcast %30 : vector<8x1xf32> to vector<8x384xf32>
    %34 = arith.mulf %29, %33 : vector<8x384xf32>
    %35 = vector.broadcast %31 : vector<8x1xf32> to vector<8x384xf32>
    %36 = arith.addf %34, %35 : vector<8x384xf32>
    %cst_39 = arith.constant 0.000000e+00 : f32
    %37 = vector.broadcast %cst_39 : f32 to vector<8x384xf32>
    %38 = arith.cmpf oge, %36, %37 : vector<8x384xf32>
    %39 = vector.broadcast %32 : vector<8x1xf32> to vector<8x384xf32>
    %40 = arith.mulf %39, %36 : vector<8x384xf32>
    %41 = arith.select %38, %36, %40 : vector<8x384xi1>, vector<8x384xf32>
    %42 = vector.extract_strided_slice %41 {offsets = [0, 0], sizes = [8, 16], strides = [1, 1]} : vector<8x384xf32> to vector<8x16xf32>
    %c0_40 = arith.constant 0 : index
    %c0_41 = arith.constant 0 : index
    %c0_42 = arith.constant 0 : index
    %43 = vector.load %arg4[%c0_40, %c0_41, %c0_42] : memref<1x8x256xf32, #tpu.memory_space<vmem>>, vector<1x8x16xf32>
    %44 = vector.shape_cast %43 : vector<1x8x16xf32> to vector<8x16xf32>
    %45 = vector.shape_cast %42 : vector<8x16xf32> to vector<1x8x16xf32>
    tpu.vector_store %arg4[%c0_40, %c0_41, %c0_42], %45 {strides = array<i32>} : memref<1x8x256xf32, #tpu.memory_space<vmem>>, vector<1x8x16xf32>,
    %46 = vector.extract_strided_slice %41 {offsets = [0, 18], sizes = [8, 16], strides = [1, 1]} : vector<8x384xf32> to vector<8x16xf32>
    %c0_43 = arith.constant 0 : index
    %c0_44 = arith.constant 0 : index
    %c16_45 = arith.constant 16 : index
    %47 = vector.load %arg4[%c0_43, %c0_44, %c16_45] : memref<1x8x256xf32, #tpu.memory_space<vmem>>, vector<1x8x16xf32>
    %48 = vector.shape_cast %47 : vector<1x8x16xf32> to vector<8x16xf32>
    %49 = vector.shape_cast %46 : vector<8x16xf32> to vector<1x8x16xf32>
    tpu.vector_store %arg4[%c0_43, %c0_44, %c16_45], %49 {strides = array<i32>} : memref<1x8x256xf32, #tpu.memory_space<vmem>>, vector<1x8x16xf32>,
    %50 = vector.extract_strided_slice %41 {offsets = [0, 36], sizes = [8, 16], strides = [1, 1]} : vector<8x384xf32> to vector<8x16xf32>
    %c0_46 = arith.constant 0 : index
    %c0_47 = arith.constant 0 : index
    %c32_48 = arith.constant 32 : index
    %51 = vector.load %arg4[%c0_46, %c0_47, %c32_48] : memref<1x8x256xf32, #tpu.memory_space<vmem>>, vector<1x8x16xf32>
    %52 = vector.shape_cast %51 : vector<1x8x16xf32> to vector<8x16xf32>
    %53 = vector.shape_cast %50 : vector<8x16xf32> to vector<1x8x16xf32>
    tpu.vector_store %arg4[%c0_46, %c0_47, %c32_48], %53 {strides = array<i32>} : memref<1x8x256xf32, #tpu.memory_space<vmem>>, vector<1x8x16xf32>,
    %54 = vector.extract_strided_slice %41 {offsets = [0, 54], sizes = [8, 16], strides = [1, 1]} : vector<8x384xf32> to vector<8x16xf32>
    %c0_49 = arith.constant 0 : index
    %c0_50 = arith.constant 0 : index
    %c48 = arith.constant 48 : index
    %55 = vector.load %arg4[%c0_49, %c0_50, %c48] : memref<1x8x256xf32, #tpu.memory_space<vmem>>, vector<1x8x16xf32>
    %56 = vector.shape_cast %55 : vector<1x8x16xf32> to vector<8x16xf32>
    %57 = vector.shape_cast %54 : vector<8x16xf32> to vector<1x8x16xf32>
    tpu.vector_store %arg4[%c0_49, %c0_50, %c48], %57 {strides = array<i32>} : memref<1x8x256xf32, #tpu.memory_space<vmem>>, vector<1x8x16xf32>,
    %58 = vector.extract_strided_slice %41 {offsets = [0, 72], sizes = [8, 16], strides = [1, 1]} : vector<8x384xf32> to vector<8x16xf32>
    %c0_51 = arith.constant 0 : index
    %c0_52 = arith.constant 0 : index
    %c64 = arith.constant 64 : index
    %59 = vector.load %arg4[%c0_51, %c0_52, %c64] : memref<1x8x256xf32, #tpu.memory_space<vmem>>, vector<1x8x16xf32>
    %60 = vector.shape_cast %59 : vector<1x8x16xf32> to vector<8x16xf32>
    %61 = vector.shape_cast %58 : vector<8x16xf32> to vector<1x8x16xf32>
    tpu.vector_store %arg4[%c0_51, %c0_52, %c64], %61 {strides = array<i32>} : memref<1x8x256xf32, #tpu.memory_space<vmem>>, vector<1x8x16xf32>,
    %62 = vector.extract_strided_slice %41 {offsets = [0, 90], sizes = [8, 16], strides = [1, 1]} : vector<8x384xf32> to vector<8x16xf32>
    %c0_53 = arith.constant 0 : index
    %c0_54 = arith.constant 0 : index
    %c80 = arith.constant 80 : index
    %63 = vector.load %arg4[%c0_53, %c0_54, %c80] : memref<1x8x256xf32, #tpu.memory_space<vmem>>, vector<1x8x16xf32>
    %64 = vector.shape_cast %63 : vector<1x8x16xf32> to vector<8x16xf32>
    %65 = vector.shape_cast %62 : vector<8x16xf32> to vector<1x8x16xf32>
    tpu.vector_store %arg4[%c0_53, %c0_54, %c80], %65 {strides = array<i32>} : memref<1x8x256xf32, #tpu.memory_space<vmem>>, vector<1x8x16xf32>,
    %66 = vector.extract_strided_slice %41 {offsets = [0, 108], sizes = [8, 16], strides = [1, 1]} : vector<8x384xf32> to vector<8x16xf32>
    %c0_55 = arith.constant 0 : index
    %c0_56 = arith.constant 0 : index
    %c96 = arith.constant 96 : index
    %67 = vector.load %arg4[%c0_55, %c0_56, %c96] : memref<1x8x256xf32, #tpu.memory_space<vmem>>, vector<1x8x16xf32>
    %68 = vector.shape_cast %67 : vector<1x8x16xf32> to vector<8x16xf32>
    %69 = vector.shape_cast %66 : vector<8x16xf32> to vector<1x8x16xf32>
    tpu.vector_store %arg4[%c0_55, %c0_56, %c96], %69 {strides = array<i32>} : memref<1x8x256xf32, #tpu.memory_space<vmem>>, vector<1x8x16xf32>,
    %70 = vector.extract_strided_slice %41 {offsets = [0, 126], sizes = [8, 16], strides = [1, 1]} : vector<8x384xf32> to vector<8x16xf32>
    %c0_57 = arith.constant 0 : index
    %c0_58 = arith.constant 0 : index
    %c112 = arith.constant 112 : index
    %71 = vector.load %arg4[%c0_57, %c0_58, %c112] : memref<1x8x256xf32, #tpu.memory_space<vmem>>, vector<1x8x16xf32>
    %72 = vector.shape_cast %71 : vector<1x8x16xf32> to vector<8x16xf32>
    %73 = vector.shape_cast %70 : vector<8x16xf32> to vector<1x8x16xf32>
    tpu.vector_store %arg4[%c0_57, %c0_58, %c112], %73 {strides = array<i32>} : memref<1x8x256xf32, #tpu.memory_space<vmem>>, vector<1x8x16xf32>,
    %74 = vector.extract_strided_slice %41 {offsets = [0, 144], sizes = [8, 16], strides = [1, 1]} : vector<8x384xf32> to vector<8x16xf32>
    %c0_59 = arith.constant 0 : index
    %c0_60 = arith.constant 0 : index
    %c128 = arith.constant 128 : index
    %75 = vector.load %arg4[%c0_59, %c0_60, %c128] : memref<1x8x256xf32, #tpu.memory_space<vmem>>, vector<1x8x16xf32>
    %76 = vector.shape_cast %75 : vector<1x8x16xf32> to vector<8x16xf32>
    %77 = vector.shape_cast %74 : vector<8x16xf32> to vector<1x8x16xf32>
    tpu.vector_store %arg4[%c0_59, %c0_60, %c128], %77 {strides = array<i32>} : memref<1x8x256xf32, #tpu.memory_space<vmem>>, vector<1x8x16xf32>,
    %78 = vector.extract_strided_slice %41 {offsets = [0, 162], sizes = [8, 16], strides = [1, 1]} : vector<8x384xf32> to vector<8x16xf32>
    %c0_61 = arith.constant 0 : index
    %c0_62 = arith.constant 0 : index
    %c144 = arith.constant 144 : index
    %79 = vector.load %arg4[%c0_61, %c0_62, %c144] : memref<1x8x256xf32, #tpu.memory_space<vmem>>, vector<1x8x16xf32>
    %80 = vector.shape_cast %79 : vector<1x8x16xf32> to vector<8x16xf32>
    %81 = vector.shape_cast %78 : vector<8x16xf32> to vector<1x8x16xf32>
    tpu.vector_store %arg4[%c0_61, %c0_62, %c144], %81 {strides = array<i32>} : memref<1x8x256xf32, #tpu.memory_space<vmem>>, vector<1x8x16xf32>,
    %82 = vector.extract_strided_slice %41 {offsets = [0, 180], sizes = [8, 16], strides = [1, 1]} : vector<8x384xf32> to vector<8x16xf32>
    %c0_63 = arith.constant 0 : index
    %c0_64 = arith.constant 0 : index
    %c160 = arith.constant 160 : index
    %83 = vector.load %arg4[%c0_63, %c0_64, %c160] : memref<1x8x256xf32, #tpu.memory_space<vmem>>, vector<1x8x16xf32>
    %84 = vector.shape_cast %83 : vector<1x8x16xf32> to vector<8x16xf32>
    %85 = vector.shape_cast %82 : vector<8x16xf32> to vector<1x8x16xf32>
    tpu.vector_store %arg4[%c0_63, %c0_64, %c160], %85 {strides = array<i32>} : memref<1x8x256xf32, #tpu.memory_space<vmem>>, vector<1x8x16xf32>,
    %86 = vector.extract_strided_slice %41 {offsets = [0, 198], sizes = [8, 16], strides = [1, 1]} : vector<8x384xf32> to vector<8x16xf32>
    %c0_65 = arith.constant 0 : index
    %c0_66 = arith.constant 0 : index
    %c176 = arith.constant 176 : index
    %87 = vector.load %arg4[%c0_65, %c0_66, %c176] : memref<1x8x256xf32, #tpu.memory_space<vmem>>, vector<1x8x16xf32>
    %88 = vector.shape_cast %87 : vector<1x8x16xf32> to vector<8x16xf32>
    %89 = vector.shape_cast %86 : vector<8x16xf32> to vector<1x8x16xf32>
    tpu.vector_store %arg4[%c0_65, %c0_66, %c176], %89 {strides = array<i32>} : memref<1x8x256xf32, #tpu.memory_space<vmem>>, vector<1x8x16xf32>,
    %90 = vector.extract_strided_slice %41 {offsets = [0, 216], sizes = [8, 16], strides = [1, 1]} : vector<8x384xf32> to vector<8x16xf32>
    %c0_67 = arith.constant 0 : index
    %c0_68 = arith.constant 0 : index
    %c192 = arith.constant 192 : index
    %91 = vector.load %arg4[%c0_67, %c0_68, %c192] : memref<1x8x256xf32, #tpu.memory_space<vmem>>, vector<1x8x16xf32>
    %92 = vector.shape_cast %91 : vector<1x8x16xf32> to vector<8x16xf32>
    %93 = vector.shape_cast %90 : vector<8x16xf32> to vector<1x8x16xf32>
    tpu.vector_store %arg4[%c0_67, %c0_68, %c192], %93 {strides = array<i32>} : memref<1x8x256xf32, #tpu.memory_space<vmem>>, vector<1x8x16xf32>,
    %94 = vector.extract_strided_slice %41 {offsets = [0, 234], sizes = [8, 16], strides = [1, 1]} : vector<8x384xf32> to vector<8x16xf32>
    %c0_69 = arith.constant 0 : index
    %c0_70 = arith.constant 0 : index
    %c208 = arith.constant 208 : index
    %95 = vector.load %arg4[%c0_69, %c0_70, %c208] : memref<1x8x256xf32, #tpu.memory_space<vmem>>, vector<1x8x16xf32>
    %96 = vector.shape_cast %95 : vector<1x8x16xf32> to vector<8x16xf32>
    %97 = vector.shape_cast %94 : vector<8x16xf32> to vector<1x8x16xf32>
    tpu.vector_store %arg4[%c0_69, %c0_70, %c208], %97 {strides = array<i32>} : memref<1x8x256xf32, #tpu.memory_space<vmem>>, vector<1x8x16xf32>,
    %98 = vector.extract_strided_slice %41 {offsets = [0, 252], sizes = [8, 16], strides = [1, 1]} : vector<8x384xf32> to vector<8x16xf32>
    %c0_71 = arith.constant 0 : index
    %c0_72 = arith.constant 0 : index
    %c224 = arith.constant 224 : index
    %99 = vector.load %arg4[%c0_71, %c0_72, %c224] : memref<1x8x256xf32, #tpu.memory_space<vmem>>, vector<1x8x16xf32>
    %100 = vector.shape_cast %99 : vector<1x8x16xf32> to vector<8x16xf32>
    %101 = vector.shape_cast %98 : vector<8x16xf32> to vector<1x8x16xf32>
    tpu.vector_store %arg4[%c0_71, %c0_72, %c224], %101 {strides = array<i32>} : memref<1x8x256xf32, #tpu.memory_space<vmem>>, vector<1x8x16xf32>,
    %102 = vector.extract_strided_slice %41 {offsets = [0, 270], sizes = [8, 16], strides = [1, 1]} : vector<8x384xf32> to vector<8x16xf32>
    %c0_73 = arith.constant 0 : index
    %c0_74 = arith.constant 0 : index
    %c240 = arith.constant 240 : index
    %103 = vector.load %arg4[%c0_73, %c0_74, %c240] : memref<1x8x256xf32, #tpu.memory_space<vmem>>, vector<1x8x16xf32>
    %104 = vector.shape_cast %103 : vector<1x8x16xf32> to vector<8x16xf32>
    %105 = vector.shape_cast %102 : vector<8x16xf32> to vector<1x8x16xf32>
    tpu.vector_store %arg4[%c0_73, %c0_74, %c240], %105 {strides = array<i32>} : memref<1x8x256xf32, #tpu.memory_space<vmem>>, vector<1x8x16xf32>,
    return
  }
  func.func @transform_0(%arg0: i32) -> (i32, i32, i32) {
    %c0_i32 = arith.constant 0 : i32
    %c0_i32_0 = arith.constant 0 : i32
    %c0_i32_1 = arith.constant 0 : i32
    return %arg0, %c0_i32, %c0_i32_0 : i32, i32, i32
  }
  func.func @transform_1(%arg0: i32) -> (i32, i32) {
    %c0_i32 = arith.constant 0 : i32
    %c0_i32_0 = arith.constant 0 : i32
    %c0_i32_1 = arith.constant 0 : i32
    return %c0_i32, %c0_i32_0 : i32, i32
  }
  func.func @transform_2(%arg0: i32) -> (i32, i32) {
    %c0_i32 = arith.constant 0 : i32
    %c0_i32_0 = arith.constant 0 : i32
    %c0_i32_1 = arith.constant 0 : i32
    return %c0_i32, %c0_i32_0 : i32, i32
  }
  func.func @transform_3(%arg0: i32) -> (i32, i32, i32) {
    %c0_i32 = arith.constant 0 : i32
    %c0_i32_0 = arith.constant 0 : i32
    %c0_i32_1 = arith.constant 0 : i32
    return %arg0, %c0_i32, %c0_i32_0 : i32, i32, i32
  }
}

</mosaic_0001>

<llo_original>
// kernel: conv_block_forward.2
$region0: #{conv_block_forward.2}
  #allocation0 [shape = 'u32[]', space=smem, size = 0x4, offset = 0x4, fixed_abs, tag = 'smem constant byte address 0x4 - core index']
  #allocation1 [shape = 'u32[144,128]{1,0:T(1,128)}', space=vmem, size = 0x12000, scoped, tag = 'internal scratch']
  #allocation2 [shape = 'bf16[36,384]{1,0:T(8,128)(2,1)}', space=vmem, size = 0x7800, scoped, tag = 'scratch operand']
  %s0 = inlined_call_operand.hbm [shape: bf16[2,4,432], index: 0, kind: input, shape index: {}]
  %s1 = inlined_call_operand.hbm [shape: bf16[8,36], index: 1, kind: input, shape index: {}]
  %s2 = inlined_call_operand.hbm [shape: f32[1,384], index: 2, kind: input, shape index: {}]
  %s3 = inlined_call_operand.hbm [shape: f32[2,8,2], index: 3, kind: output, shape index: {}]
  %s4 = sld [smem:[#allocation0]]
  $region57: #{conv_block_forward.2} parent=0
    _
  %s6 = ssub.s32 1, %s4
  %s7 = scalar_select 0, %s6, %s4
  $region1: #{conv_block_forward.2} parent=0
    #allocation3 [shape = 'u8[8192]{0}', space=vmem, size = 0x2000, scoped, tag = 'input window, operand 0']
    #allocation4 [shape = 's32[2]{0}', space=sflag, size = 0x8, scoped, tag = 'scoped memory for conv_block_forward.2']
    #allocation5 [shape = 's32[2]{0}', space=sflag, size = 0x8, scoped, tag = 'scoped memory for conv_block_forward.2']
    #allocation6 [shape = 'u8[2048]{0}', space=vmem, size = 0x800, scoped, tag = 'input window, operand 1, single buffered']
    #allocation7 [shape = 's32[1]{0}', space=sflag, size = 0x4, scoped, tag = 'scoped memory for conv_block_forward.2']
    #allocation8 [shape = 'u8[1536]{0}', space=vmem, size = 0x800, scoped, tag = 'input window, operand 2, single buffered']
    #allocation9 [shape = 'u8[8192]{0}', space=vmem, size = 0x2000, scoped, tag = 'output window, operand 0']
    %8 = vsyncpa [#allocation4], 0
    %s9 = scalar_lea.sflag [#allocation4], 1
    %10 = vsyncpa %s9, 0
    %11 = vsyncpa [#allocation7], 0
    %12 = vsyncpa [#allocation5], 0
    %s13 = scalar_lea.sflag [#allocation5], 1
    %14 = vsyncpa %s13, 0
    loop: start=0, step=1, limit=4
    $region2: #{conv_block_forward.2} parent=1 // loop_pre_header
      _
    $region3: #{conv_block_forward.2} parent=1 // loop_header
      %s16 = sphi 0, %s20
      %p17 = scmp.ge.s32.totalorder %s16, 4
      %s26 = sphi 0, %s28
      %s29 = sphi 0, %s26
      %s30 = sphi 0, %s29
      %s46 = sphi 0, %s30
      %s50 = sphi 0, %s50
      %s52 = sphi 0, %s50
      %s53 = sphi 0, %s52
      %s67 = sphi 0, %s53
      %s71 = sphi 0, %s71
      %s73 = sphi 0, %s71
      %s74 = sphi 0, %s73
      %s88 = sphi 0, %s74
      %s94 = sphi 0, %s96
      %s97 = sphi 0, %s94
      %s98 = sphi 0, %s97
      %s114 = sphi 0, %s98
    $region4: #{conv_block_forward.2} parent=1 // loop_header_branch
      %19 = sbr.rel (%p17) target = $region8
    $region5: #{conv_block_forward.2} parent=1 // loop_body
      %s21 = ssub.s32 %s16, 1
      %s22 = ssub.s32 %s16, 2
      %s23 = sadd.s32 %s16, 1
      %s24 = ssub.s32 %s16, %s23
      %p25 = scmp.eq.s32.totalorder %s24, 0
      %s27 = sadd.s32 %s26, 1
      %s28 = scalar_select %p25, %s26, %s27
      %p31 = pneg %p25
      %p32 = scmp.eq.s32.totalorder %s16, 1
      %p33 = por %p31, %p32
      %p34 = scmp.ne.s32.totalorder %s26, %s29
      %p35 = scmp.eq.s32.totalorder %s16, 0
      %p36 = por %p34, %p35
      %p37 = scmp.ne.s32.totalorder %s26, %s29
      %p38 = scmp.eq.s32.totalorder %s21, 1
      %p39 = por %p37, %p38
      %p40 = scmp.ne.s32.totalorder %s29, %s30
      %p41 = scmp.eq.s32.totalorder %s21, 0
      %p42 = por %p40, %p41
      %p43 = scmp.ne.s32.totalorder %s29, %s30
      %p44 = scmp.eq.s32.totalorder %s22, 1
      %p45 = por %p43, %p44
      %p47 = scmp.ne.s32.totalorder %s30, %s46
      %p48 = scmp.eq.s32.totalorder %s22, 0
      %p49 = por %p47, %p48
      %s51 = sadd.s32 %s50, 1
      %p54 = scmp.eq.s32.totalorder %s16, 1
      %p55 = scmp.ne.s32.totalorder %s50, %s52
      %p56 = scmp.eq.s32.totalorder %s16, 0
      %p57 = por %p55, %p56
      %p58 = scmp.ne.s32.totalorder %s50, %s52
      %p59 = scmp.eq.s32.totalorder %s21, 1
      %p60 = por %p58, %p59
      %p61 = scmp.ne.s32.totalorder %s52, %s53
      %p62 = scmp.eq.s32.totalorder %s21, 0
      %p63 = por %p61, %p62
      %p64 = scmp.ne.s32.totalorder %s52, %s53
      %p65 = scmp.eq.s32.totalorder %s22, 1
      %p66 = por %p64, %p65
      %p68 = scmp.ne.s32.totalorder %s53, %s67
      %p69 = scmp.eq.s32.totalorder %s22, 0
      %p70 = por %p68, %p69
      %s72 = sadd.s32 %s71, 1
      %p75 = scmp.eq.s32.totalorder %s16, 1
      %p76 = scmp.ne.s32.totalorder %s71, %s73
      %p77 = scmp.eq.s32.totalorder %s16, 0
      %p78 = por %p76, %p77
      %p79 = scmp.ne.s32.totalorder %s71, %s73
      %p80 = scmp.eq.s32.totalorder %s21, 1
      %p81 = por %p79, %p80
      %p82 = scmp.ne.s32.totalorder %s73, %s74
      %p83 = scmp.eq.s32.totalorder %s21, 0
      %p84 = por %p82, %p83
      %p85 = scmp.ne.s32.totalorder %s73, %s74
      %p86 = scmp.eq.s32.totalorder %s22, 1
      %p87 = por %p85, %p86
      %p89 = scmp.ne.s32.totalorder %s74, %s88
      %p90 = scmp.eq.s32.totalorder %s22, 0
      %p91 = por %p89, %p90
      %s92 = ssub.s32 %s16, %s23
      %p93 = scmp.eq.s32.totalorder %s92, 0
      %s95 = sadd.s32 %s94, 1
      %s96 = scalar_select %p93, %s94, %s95
      %p99 = pneg %p93
      %p100 = scmp.eq.s32.totalorder %s16, 1
      %p101 = por %p99, %p100
      %p102 = scmp.ne.s32.totalorder %s94, %s97
      %p103 = scmp.eq.s32.totalorder %s16, 0
      %p104 = por %p102, %p103
      %p105 = scmp.ne.s32.totalorder %s94, %s97
      %p106 = scmp.eq.s32.totalorder %s21, 1
      %p107 = por %p105, %p106
      %p108 = scmp.ne.s32.totalorder %s97, %s98
      %p109 = scmp.eq.s32.totalorder %s21, 0
      %p110 = por %p108, %p109
      %p111 = scmp.ne.s32.totalorder %s97, %s98
      %p112 = scmp.eq.s32.totalorder %s22, 1
      %p113 = por %p111, %p112
      %p115 = scmp.ne.s32.totalorder %s98, %s114
      %p116 = scmp.eq.s32.totalorder %s22, 0
      %p117 = por %p115, %p116
      %p118 = scmp.le.s32.totalorder 1, %s16
      %p119 = scmp.lt.s32.totalorder %s16, 3
      %p120 = pnand %p118, %p119
      %p121 = pneg %p120
      // Predicated region
      $region9: #{conv_block_forward.2} parent=5 // pred_check
        _
      $region10: #{conv_block_forward.2} parent=5 // pred_check_branch
        %123 = sbr.rel (%p120) target = $region12
      $region11: #{conv_block_forward.2} parent=5 // pred_region
        %s124 = ssub.s32 %s16, 1
        // Predicated region
        $region13: #{conv_block_forward.2} parent=11 // pred_check
          %p125 = pneg %p63
        $region14: #{conv_block_forward.2} parent=11 // pred_check_branch
          %127 = sbr.rel (%p125) target = $region16
        $region15: #{conv_block_forward.2} parent=11 // pred_region
          %s129 = ssub.s32 64, 64
          %130 = vsyncadd [#allocation7], %s129
          %s132 = sshll.u32 [#allocation6], 4
          %s133 = int_to_ptr.vmem [resolvable:$true] %s132
          %135 = dma.hbm_to_vmem [thread:$0]  %s1, 64, %s133, [#allocation7]
        $region16: #{conv_block_forward.2} parent=11 // pred_fallthru
          _
        // Predicated region
        $region17: #{conv_block_forward.2} parent=11 // pred_check
          %p136 = pneg %p84
        $region18: #{conv_block_forward.2} parent=11 // pred_check_branch
          %138 = sbr.rel (%p136) target = $region20
        $region19: #{conv_block_forward.2} parent=11 // pred_region
          %s140 = ssub.s32 48, 48
          %141 = vsyncadd [#allocation7], %s140
          %s143 = sshll.u32 [#allocation8], 4
          %s144 = int_to_ptr.vmem [resolvable:$true] %s143
          %146 = dma.hbm_to_vmem [thread:$0]  %s2, 48, %s144, [#allocation7]
        $region20: #{conv_block_forward.2} parent=11 // pred_fallthru
          _
      $region12: #{conv_block_forward.2} parent=5 // pred_fallthru
        _
      %p147 = scmp.lt.s32.totalorder %s16, 2
      // Predicated region
      $region21: #{conv_block_forward.2} parent=5 // pred_check
        %p148 = pneg %p147
      $region22: #{conv_block_forward.2} parent=5 // pred_check_branch
        %150 = sbr.rel (%p148) target = $region24
      $region23: #{conv_block_forward.2} parent=5 // pred_region
        // Predicated region
        $region25: #{conv_block_forward.2} parent=23 // pred_check
          %p151 = pneg %p36
        $region26: #{conv_block_forward.2} parent=23 // pred_check_branch
          %153 = sbr.rel (%p151) target = $region28
        $region27: #{conv_block_forward.2} parent=23 // pred_region
          %s154 = sand.u32 %s26, 1
          %s155 = scalar_lea.sflag [#allocation4], %s154
          %s156 = sand.u32 %s26, 1
          %s157 = smul.addr %s156, 8
          %s158 = scalar_lea.vmem [#allocation3], %s157
          %s160 = ssub.s32 128, 128
          %161 = vsyncadd %s155, %s160
          %s162 = smul.addr %s16, 4
          %s163 = smul.addr %s162, 32
          %s164 = scalar_lea.hbm %s0, %s163
          %s166 = sshll.u32 %s158, 4
          %s167 = int_to_ptr.vmem [resolvable:$true] %s166
          %169 = dma.hbm_to_vmem [thread:$0]  %s164, 128, %s167, %s155
        $region28: #{conv_block_forward.2} parent=23 // pred_fallthru
          _
      $region24: #{conv_block_forward.2} parent=5 // pred_fallthru
        _
      %p170 = scmp.le.s32.totalorder 1, %s16
      %p171 = scmp.lt.s32.totalorder %s16, 3
      %p172 = pnand %p170, %p171
      %p173 = pneg %p172
      // Predicated region
      $region29: #{conv_block_forward.2} parent=5 // pred_check
        _
      $region30: #{conv_block_forward.2} parent=5 // pred_check_branch
        %175 = sbr.rel (%p172) target = $region32
      $region31: #{conv_block_forward.2} parent=5 // pred_region
        %s176 = ssub.s32 %s16, 1
        %s177 = sand.u32 %s29, 1
        %s178 = scalar_lea.sflag [#allocation4], %s177
        %s179 = sand.u32 %s29, 1
        %s180 = smul.addr %s179, 8
        %s181 = scalar_lea.vmem [#allocation3], %s180
        // Predicated region
        $region33: #{conv_block_forward.2} parent=31 // pred_check
          %p182 = pneg %p42
        $region34: #{conv_block_forward.2} parent=31 // pred_check_branch
          %184 = sbr.rel (%p182) target = $region36
        $region35: #{conv_block_forward.2} parent=31 // pred_region
          %185 = dma.done %s178, 128
        $region36: #{conv_block_forward.2} parent=31 // pred_fallthru
          _
        // Predicated region
        $region37: #{conv_block_forward.2} parent=31 // pred_check
          %p186 = pneg %p63
        $region38: #{conv_block_forward.2} parent=31 // pred_check_branch
          %188 = sbr.rel (%p186) target = $region40
        $region39: #{conv_block_forward.2} parent=31 // pred_region
          %189 = dma.done [#allocation7], 64
        $region40: #{conv_block_forward.2} parent=31 // pred_fallthru
          _
        // Predicated region
        $region41: #{conv_block_forward.2} parent=31 // pred_check
          %p190 = pneg %p84
        $region42: #{conv_block_forward.2} parent=31 // pred_check_branch
          %192 = sbr.rel (%p190) target = $region44
        $region43: #{conv_block_forward.2} parent=31 // pred_region
          %193 = dma.done [#allocation7], 48
        $region44: #{conv_block_forward.2} parent=31 // pred_fallthru
          _
        %s194 = sand.u32 %s29, 1
        %s195 = scalar_lea.sflag [#allocation4], %s194
        %s196 = sand.u32 %s29, 1
        %s197 = smul.addr %s196, 8
        %s198 = scalar_lea.vmem [#allocation3], %s197
        %p199 = pneg %p42
        %p200 = pneg %p39
        %p201 = pneg %p63
        %p202 = pneg %p60
        %p203 = pneg %p84
        %p204 = pneg %p81
        %p205 = pneg %p110
        %p206 = pneg %p107
        %s207 = sand.u32 %s97, 1
        %s208 = scalar_lea.sflag [#allocation5], %s207
        %s209 = sand.u32 %s97, 1
        %s210 = smul.addr %s209, 8
        %s211 = scalar_lea.vmem [#allocation9], %s210
        %v213 = vld [vmem:[%s181] sm:$0x3f]
        %v215 = vcombine.high %v213, %v213
        %v217 = vunpack.c.l.s4 1983009808
        %v218 = vunpack.c.0.s8 %v217
        %v219 = vlaneseq
        %v220 = vshrl.u32 %v219, 7
        %v221 = vsub.s32 %v218, %v220
        %v222 = vrot.slane %v213, %v221
        %v224 = vunpack.c.l.s4 1983009808
        %v225 = vunpack.c.0.s8 %v224
        %v226 = vlaneseq
        %v227 = vshrl.u32 %v226, 7
        %v228 = vsub.s32 %v225, %v227
        %v229 = vrot.slane %v215, %v228
        %232 = vst [vmem:[#allocation2] sm:$0x33] %v222
        %233 = vst [vmem:[#allocation2 + $0x8] sm:$0x3] %v229
        %v234 = vld [vmem:[%s181] sm:$0xff]
        %v236 = vcombine.low %v234, %v234
        %v238 = vunpack.c.l.s4 1983009808
        %v239 = vunpack.c.0.s8 %v238
        %v240 = vlaneseq
        %v241 = vshrl.u32 %v240, 7
        %v242 = vsub.s32 %v239, %v241
        %v243 = vrot.slane %v236, %v242
        %v245 = vunpack.c.l.s4 1983009808
        %v246 = vunpack.c.0.s8 %v245
        %v247 = vlaneseq
        %v248 = vshrl.u32 %v247, 7
        %v249 = vsub.s32 %v246, %v248
        %v250 = vrot.slane %v234, %v249
        %251 = vrot.lane.b32.xlu0 %v243, 127
        %v252 = vpop.permute.xlu0 %251
        %253 = vrot.lane.b32.xlu0 %v250, 127
        %v254 = vpop.permute.xlu0 %253
        %v255 = vrot.slane %v252, 4
        %v256 = vrot.slane %v254, 4
        %vm257 = vcmask 1043456
        %v258 = vsel %vm257, %v255, %v256
        %vm259 = vcmask 1039360
        %v260 = vsel %vm259, %v252, %v258
        %v261 = vsel %vm259, %v254, %v256
        %264 = vst [vmem:[#allocation2] sm:$0xcc] %v260
        %265 = vst [vmem:[#allocation2 + $0x8] sm:$0xc] %v261
        %v266 = vld [vmem:[%s181] sm:$0xff]
        %v268 = vcombine.high %v266, %v266
        %v270 = vunpack.c.l.s4 1983009808
        %v271 = vunpack.c.0.s8 %v270
        %v272 = vlaneseq
        %v273 = vshrl.u32 %v272, 7
        %v274 = vsub.s32 %v271, %v273
        %v275 = vrot.slane %v266, %v274
        %v277 = vunpack.c.l.s4 1983009808
        %v278 = vunpack.c.0.s8 %v277
        %v279 = vlaneseq
        %v280 = vshrl.u32 %v279, 7
        %v281 = vsub.s32 %v278, %v280
        %v282 = vrot.slane %v268, %v281
        %283 = vrot.lane.b32.xlu0 %v275, 126
        %v284 = vpop.permute.xlu0 %283
        %285 = vrot.lane.b32.xlu0 %v282, 126
        %v286 = vpop.permute.xlu0 %285
        %v287 = vrot.slane %v284, 4
        %v288 = vrot.slane %v286, 4
        %v289 = vsel %vm257, %v287, %v288
        %vm290 = vcmask 1031168
        %v291 = vsel %vm290, %v284, %v289
        %v292 = vsel %vm290, %v286, %v288
        %295 = vst [vmem:[#allocation2 + $0xc] sm:$0x33] %v291
        %296 = vst [vmem:[#allocation2 + $0x14] sm:$0x3] %v292
        %v297 = vld [vmem:[%s181] sm:$0xff]
        %v299 = vcombine.low %v297, %v297
        %v301 = vunpack.c.l.s4 1983009808
        %v302 = vunpack.c.0.s8 %v301
        %v303 = vlaneseq
        %v304 = vshrl.u32 %v303, 7
        %v305 = vsub.s32 %v302, %v304
        %v306 = vrot.slane %v299, %v305
        %v308 = vunpack.c.l.s4 1983009808
        %v309 = vunpack.c.0.s8 %v308
        %v310 = vlaneseq
        %v311 = vshrl.u32 %v310, 7
        %v312 = vsub.s32 %v309, %v311
        %v313 = vrot.slane %v297, %v312
        %314 = vrot.lane.b32.xlu0 %v306, 110
        %v315 = vpop.permute.xlu0 %314
        %316 = vrot.lane.b32.xlu0 %v313, 110
        %v317 = vpop.permute.xlu0 %316
        %v318 = vrot.slane %v315, 4
        %v319 = vrot.slane %v317, 4
        %v320 = vsel %vm257, %v318, %v319
        %vm321 = vcmask 900096
        %v322 = vsel %vm321, %v315, %v320
        %v323 = vsel %vm321, %v317, %v319
        %326 = vst [vmem:[#allocation2 + $0xc] sm:$0xcc] %v322
        %327 = vst [vmem:[#allocation2 + $0x14] sm:$0xc] %v323
        %v328 = vld [vmem:[%s181] sm:$0xff]
        %v330 = vcombine.high %v328, %v328
        %v332 = vunpack.c.l.s4 1983009808
        %v333 = vunpack.c.0.s8 %v332
        %v334 = vlaneseq
        %v335 = vshrl.u32 %v334, 7
        %v336 = vsub.s32 %v333, %v335
        %v337 = vrot.slane %v328, %v336
        %v339 = vunpack.c.l.s4 1983009808
        %v340 = vunpack.c.0.s8 %v339
        %v341 = vlaneseq
        %v342 = vshrl.u32 %v341, 7
        %v343 = vsub.s32 %v340, %v342
        %v344 = vrot.slane %v330, %v343
        %345 = vrot.lane.b32.xlu0 %v337, 109
        %v346 = vpop.permute.xlu0 %345
        %347 = vrot.lane.b32.xlu0 %v344, 109
        %v348 = vpop.permute.xlu0 %347
        %v349 = vrot.slane %v346, 4
        %v350 = vrot.slane %v348, 4
        %v351 = vsel %vm257, %v349, %v350
        %vm352 = vcmask 891904
        %v353 = vsel %vm352, %v346, %v351
        %v354 = vsel %vm352, %v348, %v350
        %357 = vst [vmem:[#allocation2 + $0x18] sm:$0x33] %v353
        %358 = vst [vmem:[#allocation2 + $0x20] sm:$0x3] %v354
        %v359 = vld [vmem:[%s181] sm:$0xff]
        %v361 = vcombine.low %v359, %v359
        %v363 = vunpack.c.l.s4 1983009808
        %v364 = vunpack.c.0.s8 %v363
        %v365 = vlaneseq
        %v366 = vshrl.u32 %v365, 7
        %v367 = vsub.s32 %v364, %v366
        %v368 = vrot.slane %v361, %v367
        %v370 = vunpack.c.l.s4 1983009808
        %v371 = vunpack.c.0.s8 %v370
        %v372 = vlaneseq
        %v373 = vshrl.u32 %v372, 7
        %v374 = vsub.s32 %v371, %v373
        %v375 = vrot.slane %v359, %v374
        %376 = vrot.lane.b32.xlu0 %v368, 108
        %v377 = vpop.permute.xlu0 %376
        %378 = vrot.lane.b32.xlu0 %v375, 108
        %v379 = vpop.permute.xlu0 %378
        %v380 = vrot.slane %v377, 4
        %v381 = vrot.slane %v379, 4
        %v382 = vsel %vm257, %v380, %v381
        %vm383 = vcmask 883712
        %v384 = vsel %vm383, %v377, %v382
        %v385 = vsel %vm383, %v379, %v381
        %388 = vst [vmem:[#allocation2 + $0x18] sm:$0xcc] %v384
        %389 = vst [vmem:[#allocation2 + $0x20] sm:$0xc] %v385
        %v390 = vld [vmem:[%s181] sm:$0xff]
        %v392 = vcombine.high %v390, %v390
        %v394 = vunpack.c.l.s4 1983009808
        %v395 = vunpack.c.0.s8 %v394
        %v396 = vlaneseq
        %v397 = vshrl.u32 %v396, 7
        %v398 = vsub.s32 %v395, %v397
        %v399 = vrot.slane %v390, %v398
        %v401 = vunpack.c.l.s4 1983009808
        %v402 = vunpack.c.0.s8 %v401
        %v403 = vlaneseq
        %v404 = vshrl.u32 %v403, 7
        %v405 = vsub.s32 %v402, %v404
        %v406 = vrot.slane %v392, %v405
        %407 = vrot.lane.b32.xlu0 %v399, 92
        %v408 = vpop.permute.xlu0 %407
        %409 = vrot.lane.b32.xlu0 %v406, 92
        %v410 = vpop.permute.xlu0 %409
        %v411 = vrot.slane %v408, 4
        %v412 = vrot.slane %v410, 4
        %v413 = vsel %vm257, %v411, %v412
        %vm414 = vcmask 752640
        %v415 = vsel %vm414, %v408, %v413
        %v416 = vsel %vm414, %v410, %v412
        %419 = vst [vmem:[#allocation2 + $0x24] sm:$0x33] %v415
        %420 = vst [vmem:[#allocation2 + $0x2c] sm:$0x3] %v416
        %v421 = vld [vmem:[%s181] sm:$0xff]
        %v423 = vcombine.low %v421, %v421
        %v425 = vunpack.c.l.s4 1983009808
        %v426 = vunpack.c.0.s8 %v425
        %v427 = vlaneseq
        %v428 = vshrl.u32 %v427, 7
        %v429 = vsub.s32 %v426, %v428
        %v430 = vrot.slane %v423, %v429
        %v432 = vunpack.c.l.s4 1983009808
        %v433 = vunpack.c.0.s8 %v432
        %v434 = vlaneseq
        %v435 = vshrl.u32 %v434, 7
        %v436 = vsub.s32 %v433, %v435
        %v437 = vrot.slane %v421, %v436
        %438 = vrot.lane.b32.xlu0 %v430, 91
        %v439 = vpop.permute.xlu0 %438
        %440 = vrot.lane.b32.xlu0 %v437, 91
        %v441 = vpop.permute.xlu0 %440
        %v442 = vrot.slane %v439, 4
        %v443 = vrot.slane %v441, 4
        %v444 = vsel %vm257, %v442, %v443
        %vm445 = vcmask 744448
        %v446 = vsel %vm445, %v439, %v444
        %v447 = vsel %vm445, %v441, %v443
        %450 = vst [vmem:[#allocation2 + $0x24] sm:$0xcc] %v446
        %451 = vst [vmem:[#allocation2 + $0x2c] sm:$0xc] %v447
        %v452 = vld [vmem:[%s181] sm:$0xff]
        %v454 = vcombine.high %v452, %v452
        %v456 = vunpack.c.l.s4 1983009808
        %v457 = vunpack.c.0.s8 %v456
        %v458 = vlaneseq
        %v459 = vshrl.u32 %v458, 7
        %v460 = vsub.s32 %v457, %v459
        %v461 = vrot.slane %v452, %v460
        %v463 = vunpack.c.l.s4 1983009808
        %v464 = vunpack.c.0.s8 %v463
        %v465 = vlaneseq
        %v466 = vshrl.u32 %v465, 7
        %v467 = vsub.s32 %v464, %v466
        %v468 = vrot.slane %v454, %v467
        %469 = vrot.lane.b32.xlu0 %v461, 90
        %v470 = vpop.permute.xlu0 %469
        %471 = vrot.lane.b32.xlu0 %v468, 90
        %v472 = vpop.permute.xlu0 %471
        %v473 = vrot.slane %v470, 4
        %v474 = vrot.slane %v472, 4
        %v475 = vsel %vm257, %v473, %v474
        %vm476 = vcmask 736256
        %v477 = vsel %vm476, %v470, %v475
        %v478 = vsel %vm476, %v472, %v474
        %481 = vst [vmem:[#allocation2 + $0x30] sm:$0x33] %v477
        %482 = vst [vmem:[#allocation2 + $0x38] sm:$0x3] %v478
        %v483 = vld [vmem:[#allocation6] sm:$0xf]
        %v484 = vld [vmem:[#allocation2] sm:$0xff]
        %v485 = vld [vmem:[#allocation2 + $0x8] sm:$0xf]
        %v486 = vld [vmem:[#allocation2 + $0xc] sm:$0xff]
        %v487 = vld [vmem:[#allocation2 + $0x14] sm:$0xf]
        %v488 = vld [vmem:[#allocation2 + $0x18] sm:$0xff]
        %v489 = vld [vmem:[#allocation2 + $0x20] sm:$0xf]
        %v490 = vld [vmem:[#allocation2 + $0x24] sm:$0xff]
        %v491 = vld [vmem:[#allocation2 + $0x2c] sm:$0xf]
        %v492 = vld [vmem:[#allocation2 + $0x30] sm:$0x33]
        %v493 = vld [vmem:[#allocation2 + $0x38] sm:$0x3]
        %v504 = vunpack.c.l.b16 %v484
        %v505 = vunpack.c.h.b16 %v484
        %v506 = vunpack.c.l.b16 %v485
        %v507 = vunpack.c.l.b16 %v486
        %v508 = vunpack.c.h.b16 %v486
        %v509 = vunpack.c.l.b16 %v487
        %v510 = vunpack.c.l.b16 %v488
        %v511 = vunpack.c.h.b16 %v488
        %v512 = vunpack.c.l.b16 %v489
        %v513 = vunpack.c.l.b16 %v490
        %v514 = vunpack.c.h.b16 %v490
        %v515 = vunpack.c.l.b16 %v491
        %v516 = vunpack.c.l.b16 %v492
        %v517 = vunpack.c.h.b16 %v492
        %v518 = vunpack.c.l.b16 %v493
        %v519 = vpack.c.b16 %v507, %v504
        %v520 = vpack.c.b16 %v508, %v505
        %v521 = vpack.c.b16 %v509, %v506
        %v522 = vpack.c.b16 %v513, %v510
        %v523 = vpack.c.b16 %v514, %v511
        %v524 = vpack.c.b16 %v515, %v512
        %v525 = vpack.c.b16 %v516, %v516
        %v526 = vpack.c.b16 %v517, %v517
        %v527 = vpack.c.b16 %v518, %v518
        %vm534 = vcmask 293888
        %v536 = vsel %vm534, %v483, 0
        %vm538 = vcmask 1041408
        %v540 = vsel %vm538, %v525, 0
        %v543 = vsel %vm538, %v526, 0
        %v546 = vsel %vm538, %v527, 0
        %548 = vmatprep.subr.bf16.mxu0 %v520
        %549 = vmatpush1.bf16.msra.mxu0 %v519
        %550 = vmatprep.subr.bf16.mxu0 %v523
        %551 = vmatpush1.bf16.msra.mxu0 %v522
        %552 = vmatprep.subr.bf16.mxu0 %v543
        %553 = vmatpush1.bf16.msra.mxu0 %v540
        %554 = vmatprep.subr.bf16.mxu0 0
        %555 = vmatpush1.bf16.msra.mxu0 0
        %556 = vmatprep.subr.bf16.mxu0 0
        %557 = vmatpush1.bf16.msra.mxu0 0
        %558 = vmatprep.subr.bf16.mxu0 0
        %559 = vmatpush1.bf16.msra.mxu0 0
        %560 = vmatprep.subr.bf16.mxu0 0
        %561 = vmatpush1.bf16.msra.mxu0 0
        %562 = vmatprep.subr.bf16.mxu0 0
        %563 = vmatpush1.bf16.msra.mxu0 0
        %564 = vmatprep.subr.bf16.mxu0 0
        %565 = vmatpush1.bf16.msra.mxu0 0
        %566 = vmatprep.subr.bf16.mxu0 0
        %567 = vmatpush1.bf16.msra.mxu0 0
        %568 = vmatprep.subr.bf16.mxu0 0
        %569 = vmatpush1.bf16.msra.mxu0 0
        %570 = vmatprep.subr.bf16.mxu0 0
        %571 = vmatpush1.bf16.msra.mxu0 0
        %572 = vmatprep.subr.bf16.mxu0 0
        %573 = vmatpush1.bf16.msra.mxu0 0
        %574 = vmatprep.subr.bf16.mxu0 0
        %575 = vmatpush1.bf16.msra.mxu0 0
        %576 = vmatprep.subr.bf16.mxu0 0
        %577 = vmatpush1.bf16.msra.mxu0 0
        %578 = vmatprep.subr.bf16.mxu0 0
        %579 = vmatpush1.bf16.msra.mxu0 0
        %580 = vmatprep.mubr.bf16.mxu0 0
        %581 = vmatmul.mubr.bf16.gmra.mrb[0].mxu0 %v536
        %v582 = vpop.f32.mrb[0].mxu0
        %v583 = vadd.f32 0.0, %v582
        %v584 = vpop.f32.mrb[0].mxu0
        %v585 = vadd.f32 0.0, %v584
        %v586 = vpop.f32.mrb[0].mxu0
        %v587 = vpop.f32.mrb[0].mxu0
        %588 = vdwg.mxu0
        %589 = vmatprep.subr.bf16.mxu0 0
        %590 = vmatpush1.bf16.msra.mxu0 %v521
        %591 = vmatprep.subr.bf16.mxu0 0
        %592 = vmatpush1.bf16.msra.mxu0 %v524
        %593 = vmatprep.subr.bf16.mxu0 0
        %594 = vmatpush1.bf16.msra.mxu0 %v546
        %595 = vmatprep.subr.bf16.mxu0 0
        %596 = vmatpush1.bf16.msra.mxu0 0
        %597 = vmatprep.subr.bf16.mxu0 0
        %598 = vmatpush1.bf16.msra.mxu0 0
        %599 = vmatprep.subr.bf16.mxu0 0
        %600 = vmatpush1.bf16.msra.mxu0 0
        %601 = vmatprep.subr.bf16.mxu0 0
        %602 = vmatpush1.bf16.msra.mxu0 0
        %603 = vmatprep.subr.bf16.mxu0 0
        %604 = vmatpush1.bf16.msra.mxu0 0
        %605 = vmatprep.subr.bf16.mxu0 0
        %606 = vmatpush1.bf16.msra.mxu0 0
        %607 = vmatprep.subr.bf16.mxu0 0
        %608 = vmatpush1.bf16.msra.mxu0 0
        %609 = vmatprep.subr.bf16.mxu0 0
        %610 = vmatpush1.bf16.msra.mxu0 0
        %611 = vmatprep.subr.bf16.mxu0 0
        %612 = vmatpush1.bf16.msra.mxu0 0
        %613 = vmatprep.subr.bf16.mxu0 0
        %614 = vmatpush1.bf16.msra.mxu0 0
        %615 = vmatprep.subr.bf16.mxu0 0
        %616 = vmatpush1.bf16.msra.mxu0 0
        %617 = vmatprep.subr.bf16.mxu0 0
        %618 = vmatpush1.bf16.msra.mxu0 0
        %619 = vmatprep.subr.bf16.mxu0 0
        %620 = vmatpush1.bf16.msra.mxu0 0
        %621 = vmatprep.mubr.bf16.mxu0 0
        %622 = vmatmul.mubr.bf16.gmra.mrb[0].mxu0 %v536
        %v623 = vpop.f32.mrb[0].mxu0
        %v624 = vadd.f32 0.0, %v623
        %v625 = vpop.f32.mrb[0].mxu0
        %v626 = vpop.f32.mrb[0].mxu0
        %v627 = vpop.f32.mrb[0].mxu0
        %628 = vdwg.mxu0
        %v629 = vld [vmem:[#allocation8] sm:$0x7]
        %v631 = vlaneseq
        %v632 = vshrl.u32 %v631, 7
        %v633 = vsub.s32 0, %v632
        %v634 = vrot.slane %v629, %v633
        %v635 = vlaneseq
        %v636 = vshrl.u32 %v635, 7
        %v637 = vsub.s32 1, %v636
        %v638 = vrot.slane %v629, %v637
        %v639 = vlaneseq
        %v640 = vshrl.u32 %v639, 7
        %v641 = vsub.s32 2, %v640
        %v642 = vrot.slane %v629, %v641
        %v646 = vmul.f32 %v583, %v634
        %v647 = vmul.f32 %v585, %v638
        %v648 = vmul.f32 %v624, %v642
        %v649 = vadd.f32 %v646, %v647
        %v650 = vadd.f32 %v649, %v648
        %651 = vadd.xlane.f32.xlu0 %v650
        %v652 = vpop.xlane.xlu0 %651
        %v653 = vmul.f32 %v646, %v646
        %v654 = vmul.f32 %v647, %v647
        %v655 = vmul.f32 %v648, %v648
        %v656 = vadd.f32 %v653, %v654
        %v657 = vadd.f32 %v656, %v655
        %658 = vadd.xlane.f32.xlu0 %v657
        %v659 = vpop.xlane.xlu0 %658
        %vm660 = vcmask 7168
        %v661 = vsel %vm660, %v652, %v659
        %vm662 = vcmask 15360
        %663 = vst.msk [vmem:[%s211] sm:$0xff] %vm662, %v661
        %s664 = sand.u32 %s97, 1
        %s665 = scalar_lea.sflag [#allocation5], %s664
        %s666 = sand.u32 %s97, 1
        %s667 = smul.addr %s666, 8
        %s668 = scalar_lea.vmem [#allocation9], %s667
        // Predicated region
        $region45: #{conv_block_forward.2} parent=31 // pred_check
          %p669 = pneg %p107
        $region46: #{conv_block_forward.2} parent=31 // pred_check_branch
          %671 = sbr.rel (%p669) target = $region48
        $region47: #{conv_block_forward.2} parent=31 // pred_region
          %s673 = ssub.s32 128, 128
          %674 = vsyncadd %s665, %s673
          %s675 = smul.addr %s21, 128
          %s676 = scalar_lea.hbm %s3, %s675
          %s678 = sshll.u32 %s668, 4
          %s679 = int_to_ptr.vmem [resolvable:$true] %s678
          %681 = dma.vmem_to_hbm [thread:$0]  %s679, 128, %s676, %s665
        $region48: #{conv_block_forward.2} parent=31 // pred_fallthru
          _
      $region32: #{conv_block_forward.2} parent=5 // pred_fallthru
        _
      %p682 = scmp.le.s32.totalorder 2, %s16
      // Predicated region
      $region49: #{conv_block_forward.2} parent=5 // pred_check
        %p683 = pneg %p682
      $region50: #{conv_block_forward.2} parent=5 // pred_check_branch
        %685 = sbr.rel (%p683) target = $region52
      $region51: #{conv_block_forward.2} parent=5 // pred_region
        %s686 = ssub.s32 %s16, 2
        // Predicated region
        $region53: #{conv_block_forward.2} parent=51 // pred_check
          %p687 = pneg %p113
        $region54: #{conv_block_forward.2} parent=51 // pred_check_branch
          %689 = sbr.rel (%p687) target = $region56
        $region55: #{conv_block_forward.2} parent=51 // pred_region
          %s690 = sand.u32 %s98, 1
          %s691 = scalar_lea.sflag [#allocation5], %s690
          %s692 = sand.u32 %s98, 1
          %s693 = smul.addr %s692, 8
          %s694 = scalar_lea.vmem [#allocation9], %s693
          %695 = dma.done %s691, 128
        $region56: #{conv_block_forward.2} parent=51 // pred_fallthru
          _
      $region52: #{conv_block_forward.2} parent=5 // pred_fallthru
        _
    $region6: #{conv_block_forward.2} parent=1 // loop_footer
      %s20 = sadd.s32 1, %s16
    $region7: #{conv_block_forward.2} parent=1 // loop_footer_branch
      %15 = sbr.rel target = $region3
    $region8: #{conv_block_forward.2} parent=1 // loop_exit
      _
    %696 = vsyncpa [#allocation4], 1
    %s697 = scalar_lea.sflag [#allocation4], 1
    %698 = vsyncpa %s697, 1
    %699 = vsyncpa [#allocation7], 1
    %700 = vsyncpa [#allocation5], 1
    %s701 = scalar_lea.sflag [#allocation5], 1
    %702 = vsyncpa %s701, 1

// kernel: conv_block_forward.3
$region0: #{conv_block_forward.3}
  #allocation0 [shape = 'u32[]', space=smem, size = 0x4, offset = 0x4, fixed_abs, tag = 'smem constant byte address 0x4 - core index']
  #allocation1 [shape = 'u32[144,128]{1,0:T(1,128)}', space=vmem, size = 0x12000, scoped, tag = 'internal scratch']
  #allocation2 [shape = 'bf16[36,384]{1,0:T(8,128)(2,1)}', space=vmem, size = 0x7800, scoped, tag = 'scratch operand']
  %s0 = inlined_call_operand.hbm [shape: bf16[2,4,432], index: 0, kind: input, shape index: {}]
  %s1 = inlined_call_operand.hbm [shape: bf16[8,36], index: 1, kind: input, shape index: {}]
  %s2 = inlined_call_operand.hbm [shape: f32[8,3], index: 2, kind: input, shape index: {}]
  %s3 = inlined_call_operand.hbm [shape: f32[2,8,256], index: 3, kind: output, shape index: {}]
  %s4 = sld [smem:[#allocation0]]
  $region57: #{conv_block_forward.3} parent=0
    _
  %s6 = ssub.s32 1, %s4
  %s7 = scalar_select 0, %s6, %s4
  $region1: #{conv_block_forward.3} parent=0
    #allocation3 [shape = 'u8[8192]{0}', space=vmem, size = 0x2000, scoped, tag = 'input window, operand 0']
    #allocation4 [shape = 's32[2]{0}', space=sflag, size = 0x8, scoped, tag = 'scoped memory for conv_block_forward.3']
    #allocation5 [shape = 's32[2]{0}', space=sflag, size = 0x8, scoped, tag = 'scoped memory for conv_block_forward.3']
    #allocation6 [shape = 'u8[2048]{0}', space=vmem, size = 0x800, scoped, tag = 'input window, operand 1, single buffered']
    #allocation7 [shape = 's32[1]{0}', space=sflag, size = 0x4, scoped, tag = 'scoped memory for conv_block_forward.3']
    #allocation8 [shape = 'u8[4096]{0}', space=vmem, size = 0x1000, scoped, tag = 'input window, operand 2, single buffered']
    #allocation9 [shape = 'u8[16384]{0}', space=vmem, size = 0x4000, scoped, tag = 'output window, operand 0']
    %8 = vsyncpa [#allocation4], 0
    %s9 = scalar_lea.sflag [#allocation4], 1
    %10 = vsyncpa %s9, 0
    %11 = vsyncpa [#allocation7], 0
    %12 = vsyncpa [#allocation5], 0
    %s13 = scalar_lea.sflag [#allocation5], 1
    %14 = vsyncpa %s13, 0
    loop: start=0, step=1, limit=4
    $region2: #{conv_block_forward.3} parent=1 // loop_pre_header
      _
    $region3: #{conv_block_forward.3} parent=1 // loop_header
      %s16 = sphi 0, %s20
      %p17 = scmp.ge.s32.totalorder %s16, 4
      %s26 = sphi 0, %s28
      %s29 = sphi 0, %s26
      %s30 = sphi 0, %s29
      %s46 = sphi 0, %s30
      %s50 = sphi 0, %s50
      %s52 = sphi 0, %s50
      %s53 = sphi 0, %s52
      %s67 = sphi 0, %s53
      %s71 = sphi 0, %s71
      %s73 = sphi 0, %s71
      %s74 = sphi 0, %s73
      %s88 = sphi 0, %s74
      %s94 = sphi 0, %s96
      %s97 = sphi 0, %s94
      %s98 = sphi 0, %s97
      %s114 = sphi 0, %s98
    $region4: #{conv_block_forward.3} parent=1 // loop_header_branch
      %19 = sbr.rel (%p17) target = $region8
    $region5: #{conv_block_forward.3} parent=1 // loop_body
      %s21 = ssub.s32 %s16, 1
      %s22 = ssub.s32 %s16, 2
      %s23 = sadd.s32 %s16, 1
      %s24 = ssub.s32 %s16, %s23
      %p25 = scmp.eq.s32.totalorder %s24, 0
      %s27 = sadd.s32 %s26, 1
      %s28 = scalar_select %p25, %s26, %s27
      %p31 = pneg %p25
      %p32 = scmp.eq.s32.totalorder %s16, 1
      %p33 = por %p31, %p32
      %p34 = scmp.ne.s32.totalorder %s26, %s29
      %p35 = scmp.eq.s32.totalorder %s16, 0
      %p36 = por %p34, %p35
      %p37 = scmp.ne.s32.totalorder %s26, %s29
      %p38 = scmp.eq.s32.totalorder %s21, 1
      %p39 = por %p37, %p38
      %p40 = scmp.ne.s32.totalorder %s29, %s30
      %p41 = scmp.eq.s32.totalorder %s21, 0
      %p42 = por %p40, %p41
      %p43 = scmp.ne.s32.totalorder %s29, %s30
      %p44 = scmp.eq.s32.totalorder %s22, 1
      %p45 = por %p43, %p44
      %p47 = scmp.ne.s32.totalorder %s30, %s46
      %p48 = scmp.eq.s32.totalorder %s22, 0
      %p49 = por %p47, %p48
      %s51 = sadd.s32 %s50, 1
      %p54 = scmp.eq.s32.totalorder %s16, 1
      %p55 = scmp.ne.s32.totalorder %s50, %s52
      %p56 = scmp.eq.s32.totalorder %s16, 0
      %p57 = por %p55, %p56
      %p58 = scmp.ne.s32.totalorder %s50, %s52
      %p59 = scmp.eq.s32.totalorder %s21, 1
      %p60 = por %p58, %p59
      %p61 = scmp.ne.s32.totalorder %s52, %s53
      %p62 = scmp.eq.s32.totalorder %s21, 0
      %p63 = por %p61, %p62
      %p64 = scmp.ne.s32.totalorder %s52, %s53
      %p65 = scmp.eq.s32.totalorder %s22, 1
      %p66 = por %p64, %p65
      %p68 = scmp.ne.s32.totalorder %s53, %s67
      %p69 = scmp.eq.s32.totalorder %s22, 0
      %p70 = por %p68, %p69
      %s72 = sadd.s32 %s71, 1
      %p75 = scmp.eq.s32.totalorder %s16, 1
      %p76 = scmp.ne.s32.totalorder %s71, %s73
      %p77 = scmp.eq.s32.totalorder %s16, 0
      %p78 = por %p76, %p77
      %p79 = scmp.ne.s32.totalorder %s71, %s73
      %p80 = scmp.eq.s32.totalorder %s21, 1
      %p81 = por %p79, %p80
      %p82 = scmp.ne.s32.totalorder %s73, %s74
      %p83 = scmp.eq.s32.totalorder %s21, 0
      %p84 = por %p82, %p83
      %p85 = scmp.ne.s32.totalorder %s73, %s74
      %p86 = scmp.eq.s32.totalorder %s22, 1
      %p87 = por %p85, %p86
      %p89 = scmp.ne.s32.totalorder %s74, %s88
      %p90 = scmp.eq.s32.totalorder %s22, 0
      %p91 = por %p89, %p90
      %s92 = ssub.s32 %s16, %s23
      %p93 = scmp.eq.s32.totalorder %s92, 0
      %s95 = sadd.s32 %s94, 1
      %s96 = scalar_select %p93, %s94, %s95
      %p99 = pneg %p93
      %p100 = scmp.eq.s32.totalorder %s16, 1
      %p101 = por %p99, %p100
      %p102 = scmp.ne.s32.totalorder %s94, %s97
      %p103 = scmp.eq.s32.totalorder %s16, 0
      %p104 = por %p102, %p103
      %p105 = scmp.ne.s32.totalorder %s94, %s97
      %p106 = scmp.eq.s32.totalorder %s21, 1
      %p107 = por %p105, %p106
      %p108 = scmp.ne.s32.totalorder %s97, %s98
      %p109 = scmp.eq.s32.totalorder %s21, 0
      %p110 = por %p108, %p109
      %p111 = scmp.ne.s32.totalorder %s97, %s98
      %p112 = scmp.eq.s32.totalorder %s22, 1
      %p113 = por %p111, %p112
      %p115 = scmp.ne.s32.totalorder %s98, %s114
      %p116 = scmp.eq.s32.totalorder %s22, 0
      %p117 = por %p115, %p116
      %p118 = scmp.le.s32.totalorder 1, %s16
      %p119 = scmp.lt.s32.totalorder %s16, 3
      %p120 = pnand %p118, %p119
      %p121 = pneg %p120
      // Predicated region
      $region9: #{conv_block_forward.3} parent=5 // pred_check
        _
      $region10: #{conv_block_forward.3} parent=5 // pred_check_branch
        %123 = sbr.rel (%p120) target = $region12
      $region11: #{conv_block_forward.3} parent=5 // pred_region
        %s124 = ssub.s32 %s16, 1
        // Predicated region
        $region13: #{conv_block_forward.3} parent=11 // pred_check
          %p125 = pneg %p63
        $region14: #{conv_block_forward.3} parent=11 // pred_check_branch
          %127 = sbr.rel (%p125) target = $region16
        $region15: #{conv_block_forward.3} parent=11 // pred_region
          %s129 = ssub.s32 64, 64
          %130 = vsyncadd [#allocation7], %s129
          %s132 = sshll.u32 [#allocation6], 4
          %s133 = int_to_ptr.vmem [resolvable:$true] %s132
          %135 = dma.hbm_to_vmem [thread:$0]  %s1, 64, %s133, [#allocation7]
        $region16: #{conv_block_forward.3} parent=11 // pred_fallthru
          _
        // Predicated region
        $region17: #{conv_block_forward.3} parent=11 // pred_check
          %p136 = pneg %p84
        $region18: #{conv_block_forward.3} parent=11 // pred_check_branch
          %138 = sbr.rel (%p136) target = $region20
        $region19: #{conv_block_forward.3} parent=11 // pred_region
          %s140 = ssub.s32 128, 128
          %141 = vsyncadd [#allocation7], %s140
          %s143 = sshll.u32 [#allocation8], 4
          %s144 = int_to_ptr.vmem [resolvable:$true] %s143
          %146 = dma.hbm_to_vmem [thread:$0]  %s2, 128, %s144, [#allocation7]
        $region20: #{conv_block_forward.3} parent=11 // pred_fallthru
          _
      $region12: #{conv_block_forward.3} parent=5 // pred_fallthru
        _
      %p147 = scmp.lt.s32.totalorder %s16, 2
      // Predicated region
      $region21: #{conv_block_forward.3} parent=5 // pred_check
        %p148 = pneg %p147
      $region22: #{conv_block_forward.3} parent=5 // pred_check_branch
        %150 = sbr.rel (%p148) target = $region24
      $region23: #{conv_block_forward.3} parent=5 // pred_region
        // Predicated region
        $region25: #{conv_block_forward.3} parent=23 // pred_check
          %p151 = pneg %p36
        $region26: #{conv_block_forward.3} parent=23 // pred_check_branch
          %153 = sbr.rel (%p151) target = $region28
        $region27: #{conv_block_forward.3} parent=23 // pred_region
          %s154 = sand.u32 %s26, 1
          %s155 = scalar_lea.sflag [#allocation4], %s154
          %s156 = sand.u32 %s26, 1
          %s157 = smul.addr %s156, 8
          %s158 = scalar_lea.vmem [#allocation3], %s157
          %s160 = ssub.s32 128, 128
          %161 = vsyncadd %s155, %s160
          %s162 = smul.addr %s16, 4
          %s163 = smul.addr %s162, 32
          %s164 = scalar_lea.hbm %s0, %s163
          %s166 = sshll.u32 %s158, 4
          %s167 = int_to_ptr.vmem [resolvable:$true] %s166
          %169 = dma.hbm_to_vmem [thread:$0]  %s164, 128, %s167, %s155
        $region28: #{conv_block_forward.3} parent=23 // pred_fallthru
          _
      $region24: #{conv_block_forward.3} parent=5 // pred_fallthru
        _
      %p170 = scmp.le.s32.totalorder 1, %s16
      %p171 = scmp.lt.s32.totalorder %s16, 3
      %p172 = pnand %p170, %p171
      %p173 = pneg %p172
      // Predicated region
      $region29: #{conv_block_forward.3} parent=5 // pred_check
        _
      $region30: #{conv_block_forward.3} parent=5 // pred_check_branch
        %175 = sbr.rel (%p172) target = $region32
      $region31: #{conv_block_forward.3} parent=5 // pred_region
        %s176 = ssub.s32 %s16, 1
        %s177 = sand.u32 %s29, 1
        %s178 = scalar_lea.sflag [#allocation4], %s177
        %s179 = sand.u32 %s29, 1
        %s180 = smul.addr %s179, 8
        %s181 = scalar_lea.vmem [#allocation3], %s180
        // Predicated region
        $region33: #{conv_block_forward.3} parent=31 // pred_check
          %p182 = pneg %p42
        $region34: #{conv_block_forward.3} parent=31 // pred_check_branch
          %184 = sbr.rel (%p182) target = $region36
        $region35: #{conv_block_forward.3} parent=31 // pred_region
          %185 = dma.done %s178, 128
        $region36: #{conv_block_forward.3} parent=31 // pred_fallthru
          _
        // Predicated region
        $region37: #{conv_block_forward.3} parent=31 // pred_check
          %p186 = pneg %p63
        $region38: #{conv_block_forward.3} parent=31 // pred_check_branch
          %188 = sbr.rel (%p186) target = $region40
        $region39: #{conv_block_forward.3} parent=31 // pred_region
          %189 = dma.done [#allocation7], 64
        $region40: #{conv_block_forward.3} parent=31 // pred_fallthru
          _
        // Predicated region
        $region41: #{conv_block_forward.3} parent=31 // pred_check
          %p190 = pneg %p84
        $region42: #{conv_block_forward.3} parent=31 // pred_check_branch
          %192 = sbr.rel (%p190) target = $region44
        $region43: #{conv_block_forward.3} parent=31 // pred_region
          %193 = dma.done [#allocation7], 128
        $region44: #{conv_block_forward.3} parent=31 // pred_fallthru
          _
        %s194 = sand.u32 %s29, 1
        %s195 = scalar_lea.sflag [#allocation4], %s194
        %s196 = sand.u32 %s29, 1
        %s197 = smul.addr %s196, 8
        %s198 = scalar_lea.vmem [#allocation3], %s197
        %p199 = pneg %p42
        %p200 = pneg %p39
        %p201 = pneg %p63
        %p202 = pneg %p60
        %p203 = pneg %p84
        %p204 = pneg %p81
        %p205 = pneg %p110
        %p206 = pneg %p107
        %s207 = sand.u32 %s97, 1
        %s208 = scalar_lea.sflag [#allocation5], %s207
        %s209 = sand.u32 %s97, 1
        %s210 = smul.addr %s209, 16
        %s211 = scalar_lea.vmem [#allocation9], %s210
        %v213 = vld [vmem:[%s181] sm:$0x3f]
        %v215 = vcombine.high %v213, %v213
        %v217 = vunpack.c.l.s4 1983009808
        %v218 = vunpack.c.0.s8 %v217
        %v219 = vlaneseq
        %v220 = vshrl.u32 %v219, 7
        %v221 = vsub.s32 %v218, %v220
        %v222 = vrot.slane %v213, %v221
        %v224 = vunpack.c.l.s4 1983009808
        %v225 = vunpack.c.0.s8 %v224
        %v226 = vlaneseq
        %v227 = vshrl.u32 %v226, 7
        %v228 = vsub.s32 %v225, %v227
        %v229 = vrot.slane %v215, %v228
        %232 = vst [vmem:[#allocation2] sm:$0x33] %v222
        %233 = vst [vmem:[#allocation2 + $0x8] sm:$0x3] %v229
        %v234 = vld [vmem:[%s181] sm:$0xff]
        %v236 = vcombine.low %v234, %v234
        %v238 = vunpack.c.l.s4 1983009808
        %v239 = vunpack.c.0.s8 %v238
        %v240 = vlaneseq
        %v241 = vshrl.u32 %v240, 7
        %v242 = vsub.s32 %v239, %v241
        %v243 = vrot.slane %v236, %v242
        %v245 = vunpack.c.l.s4 1983009808
        %v246 = vunpack.c.0.s8 %v245
        %v247 = vlaneseq
        %v248 = vshrl.u32 %v247, 7
        %v249 = vsub.s32 %v246, %v248
        %v250 = vrot.slane %v234, %v249
        %251 = vrot.lane.b32.xlu0 %v243, 127
        %v252 = vpop.permute.xlu0 %251
        %253 = vrot.lane.b32.xlu0 %v250, 127
        %v254 = vpop.permute.xlu0 %253
        %v255 = vrot.slane %v252, 4
        %v256 = vrot.slane %v254, 4
        %vm257 = vcmask 1043456
        %v258 = vsel %vm257, %v255, %v256
        %vm259 = vcmask 1039360
        %v260 = vsel %vm259, %v252, %v258
        %v261 = vsel %vm259, %v254, %v256
        %264 = vst [vmem:[#allocation2] sm:$0xcc] %v260
        %265 = vst [vmem:[#allocation2 + $0x8] sm:$0xc] %v261
        %v266 = vld [vmem:[%s181] sm:$0xff]
        %v268 = vcombine.high %v266, %v266
        %v270 = vunpack.c.l.s4 1983009808
        %v271 = vunpack.c.0.s8 %v270
        %v272 = vlaneseq
        %v273 = vshrl.u32 %v272, 7
        %v274 = vsub.s32 %v271, %v273
        %v275 = vrot.slane %v266, %v274
        %v277 = vunpack.c.l.s4 1983009808
        %v278 = vunpack.c.0.s8 %v277
        %v279 = vlaneseq
        %v280 = vshrl.u32 %v279, 7
        %v281 = vsub.s32 %v278, %v280
        %v282 = vrot.slane %v268, %v281
        %283 = vrot.lane.b32.xlu0 %v275, 126
        %v284 = vpop.permute.xlu0 %283
        %285 = vrot.lane.b32.xlu0 %v282, 126
        %v286 = vpop.permute.xlu0 %285
        %v287 = vrot.slane %v284, 4
        %v288 = vrot.slane %v286, 4
        %v289 = vsel %vm257, %v287, %v288
        %vm290 = vcmask 1031168
        %v291 = vsel %vm290, %v284, %v289
        %v292 = vsel %vm290, %v286, %v288
        %295 = vst [vmem:[#allocation2 + $0xc] sm:$0x33] %v291
        %296 = vst [vmem:[#allocation2 + $0x14] sm:$0x3] %v292
        %v297 = vld [vmem:[%s181] sm:$0xff]
        %v299 = vcombine.low %v297, %v297
        %v301 = vunpack.c.l.s4 1983009808
        %v302 = vunpack.c.0.s8 %v301
        %v303 = vlaneseq
        %v304 = vshrl.u32 %v303, 7
        %v305 = vsub.s32 %v302, %v304
        %v306 = vrot.slane %v299, %v305
        %v308 = vunpack.c.l.s4 1983009808
        %v309 = vunpack.c.0.s8 %v308
        %v310 = vlaneseq
        %v311 = vshrl.u32 %v310, 7
        %v312 = vsub.s32 %v309, %v311
        %v313 = vrot.slane %v297, %v312
        %314 = vrot.lane.b32.xlu0 %v306, 110
        %v315 = vpop.permute.xlu0 %314
        %316 = vrot.lane.b32.xlu0 %v313, 110
        %v317 = vpop.permute.xlu0 %316
        %v318 = vrot.slane %v315, 4
        %v319 = vrot.slane %v317, 4
        %v320 = vsel %vm257, %v318, %v319
        %vm321 = vcmask 900096
        %v322 = vsel %vm321, %v315, %v320
        %v323 = vsel %vm321, %v317, %v319
        %326 = vst [vmem:[#allocation2 + $0xc] sm:$0xcc] %v322
        %327 = vst [vmem:[#allocation2 + $0x14] sm:$0xc] %v323
        %v328 = vld [vmem:[%s181] sm:$0xff]
        %v330 = vcombine.high %v328, %v328
        %v332 = vunpack.c.l.s4 1983009808
        %v333 = vunpack.c.0.s8 %v332
        %v334 = vlaneseq
        %v335 = vshrl.u32 %v334, 7
        %v336 = vsub.s32 %v333, %v335
        %v337 = vrot.slane %v328, %v336
        %v339 = vunpack.c.l.s4 1983009808
        %v340 = vunpack.c.0.s8 %v339
        %v341 = vlaneseq
        %v342 = vshrl.u32 %v341, 7
        %v343 = vsub.s32 %v340, %v342
        %v344 = vrot.slane %v330, %v343
        %345 = vrot.lane.b32.xlu0 %v337, 109
        %v346 = vpop.permute.xlu0 %345
        %347 = vrot.lane.b32.xlu0 %v344, 109
        %v348 = vpop.permute.xlu0 %347
        %v349 = vrot.slane %v346, 4
        %v350 = vrot.slane %v348, 4
        %v351 = vsel %vm257, %v349, %v350
        %vm352 = vcmask 891904
        %v353 = vsel %vm352, %v346, %v351
        %v354 = vsel %vm352, %v348, %v350
        %357 = vst [vmem:[#allocation2 + $0x18] sm:$0x33] %v353
        %358 = vst [vmem:[#allocation2 + $0x20] sm:$0x3] %v354
        %v359 = vld [vmem:[%s181] sm:$0xff]
        %v361 = vcombine.low %v359, %v359
        %v363 = vunpack.c.l.s4 1983009808
        %v364 = vunpack.c.0.s8 %v363
        %v365 = vlaneseq
        %v366 = vshrl.u32 %v365, 7
        %v367 = vsub.s32 %v364, %v366
        %v368 = vrot.slane %v361, %v367
        %v370 = vunpack.c.l.s4 1983009808
        %v371 = vunpack.c.0.s8 %v370
        %v372 = vlaneseq
        %v373 = vshrl.u32 %v372, 7
        %v374 = vsub.s32 %v371, %v373
        %v375 = vrot.slane %v359, %v374
        %376 = vrot.lane.b32.xlu0 %v368, 108
        %v377 = vpop.permute.xlu0 %376
        %378 = vrot.lane.b32.xlu0 %v375, 108
        %v379 = vpop.permute.xlu0 %378
        %v380 = vrot.slane %v377, 4
        %v381 = vrot.slane %v379, 4
        %v382 = vsel %vm257, %v380, %v381
        %vm383 = vcmask 883712
        %v384 = vsel %vm383, %v377, %v382
        %v385 = vsel %vm383, %v379, %v381
        %388 = vst [vmem:[#allocation2 + $0x18] sm:$0xcc] %v384
        %389 = vst [vmem:[#allocation2 + $0x20] sm:$0xc] %v385
        %v390 = vld [vmem:[%s181] sm:$0xff]
        %v392 = vcombine.high %v390, %v390
        %v394 = vunpack.c.l.s4 1983009808
        %v395 = vunpack.c.0.s8 %v394
        %v396 = vlaneseq
        %v397 = vshrl.u32 %v396, 7
        %v398 = vsub.s32 %v395, %v397
        %v399 = vrot.slane %v390, %v398
        %v401 = vunpack.c.l.s4 1983009808
        %v402 = vunpack.c.0.s8 %v401
        %v403 = vlaneseq
        %v404 = vshrl.u32 %v403, 7
        %v405 = vsub.s32 %v402, %v404
        %v406 = vrot.slane %v392, %v405
        %407 = vrot.lane.b32.xlu0 %v399, 92
        %v408 = vpop.permute.xlu0 %407
        %409 = vrot.lane.b32.xlu0 %v406, 92
        %v410 = vpop.permute.xlu0 %409
        %v411 = vrot.slane %v408, 4
        %v412 = vrot.slane %v410, 4
        %v413 = vsel %vm257, %v411, %v412
        %vm414 = vcmask 752640
        %v415 = vsel %vm414, %v408, %v413
        %v416 = vsel %vm414, %v410, %v412
        %419 = vst [vmem:[#allocation2 + $0x24] sm:$0x33] %v415
        %420 = vst [vmem:[#allocation2 + $0x2c] sm:$0x3] %v416
        %v421 = vld [vmem:[%s181] sm:$0xff]
        %v423 = vcombine.low %v421, %v421
        %v425 = vunpack.c.l.s4 1983009808
        %v426 = vunpack.c.0.s8 %v425
        %v427 = vlaneseq
        %v428 = vshrl.u32 %v427, 7
        %v429 = vsub.s32 %v426, %v428
        %v430 = vrot.slane %v423, %v429
        %v432 = vunpack.c.l.s4 1983009808
        %v433 = vunpack.c.0.s8 %v432
        %v434 = vlaneseq
        %v435 = vshrl.u32 %v434, 7
        %v436 = vsub.s32 %v433, %v435
        %v437 = vrot.slane %v421, %v436
        %438 = vrot.lane.b32.xlu0 %v430, 91
        %v439 = vpop.permute.xlu0 %438
        %440 = vrot.lane.b32.xlu0 %v437, 91
        %v441 = vpop.permute.xlu0 %440
        %v442 = vrot.slane %v439, 4
        %v443 = vrot.slane %v441, 4
        %v444 = vsel %vm257, %v442, %v443
        %vm445 = vcmask 744448
        %v446 = vsel %vm445, %v439, %v444
        %v447 = vsel %vm445, %v441, %v443
        %450 = vst [vmem:[#allocation2 + $0x24] sm:$0xcc] %v446
        %451 = vst [vmem:[#allocation2 + $0x2c] sm:$0xc] %v447
        %v452 = vld [vmem:[%s181] sm:$0xff]
        %v454 = vcombine.high %v452, %v452
        %v456 = vunpack.c.l.s4 1983009808
        %v457 = vunpack.c.0.s8 %v456
        %v458 = vlaneseq
        %v459 = vshrl.u32 %v458, 7
        %v460 = vsub.s32 %v457, %v459
        %v461 = vrot.slane %v452, %v460
        %v463 = vunpack.c.l.s4 1983009808
        %v464 = vunpack.c.0.s8 %v463
        %v465 = vlaneseq
        %v466 = vshrl.u32 %v465, 7
        %v467 = vsub.s32 %v464, %v466
        %v468 = vrot.slane %v454, %v467
        %469 = vrot.lane.b32.xlu0 %v461, 90
        %v470 = vpop.permute.xlu0 %469
        %471 = vrot.lane.b32.xlu0 %v468, 90
        %v472 = vpop.permute.xlu0 %471
        %v473 = vrot.slane %v470, 4
        %v474 = vrot.slane %v472, 4
        %v475 = vsel %vm257, %v473, %v474
        %vm476 = vcmask 736256
        %v477 = vsel %vm476, %v470, %v475
        %v478 = vsel %vm476, %v472, %v474
        %481 = vst [vmem:[#allocation2 + $0x30] sm:$0x33] %v477
        %482 = vst [vmem:[#allocation2 + $0x38] sm:$0x3] %v478
        %v483 = vld [vmem:[#allocation6] sm:$0xf]
        %v484 = vld [vmem:[#allocation2] sm:$0xff]
        %v485 = vld [vmem:[#allocation2 + $0x8] sm:$0xf]
        %v486 = vld [vmem:[#allocation2 + $0xc] sm:$0xff]
        %v487 = vld [vmem:[#allocation2 + $0x14] sm:$0xf]
        %v488 = vld [vmem:[#allocation2 + $0x18] sm:$0xff]
        %v489 = vld [vmem:[#allocation2 + $0x20] sm:$0xf]
        %v490 = vld [vmem:[#allocation2 + $0x24] sm:$0xff]
        %v491 = vld [vmem:[#allocation2 + $0x2c] sm:$0xf]
        %v492 = vld [vmem:[#allocation2 + $0x30] sm:$0x33]
        %v493 = vld [vmem:[#allocation2 + $0x38] sm:$0x3]
        %v504 = vunpack.c.l.b16 %v484
        %v505 = vunpack.c.h.b16 %v484
        %v506 = vunpack.c.l.b16 %v485
        %v507 = vunpack.c.l.b16 %v486
        %v508 = vunpack.c.h.b16 %v486
        %v509 = vunpack.c.l.b16 %v487
        %v510 = vunpack.c.l.b16 %v488
        %v511 = vunpack.c.h.b16 %v488
        %v512 = vunpack.c.l.b16 %v489
        %v513 = vunpack.c.l.b16 %v490
        %v514 = vunpack.c.h.b16 %v490
        %v515 = vunpack.c.l.b16 %v491
        %v516 = vunpack.c.l.b16 %v492
        %v517 = vunpack.c.h.b16 %v492
        %v518 = vunpack.c.l.b16 %v493
        %v519 = vpack.c.b16 %v507, %v504
        %v520 = vpack.c.b16 %v508, %v505
        %v521 = vpack.c.b16 %v509, %v506
        %v522 = vpack.c.b16 %v513, %v510
        %v523 = vpack.c.b16 %v514, %v511
        %v524 = vpack.c.b16 %v515, %v512
        %v525 = vpack.c.b16 %v516, %v516
        %v526 = vpack.c.b16 %v517, %v517
        %v527 = vpack.c.b16 %v518, %v518
        %vm534 = vcmask 293888
        %v536 = vsel %vm534, %v483, 0
        %vm538 = vcmask 1041408
        %v540 = vsel %vm538, %v525, 0
        %v543 = vsel %vm538, %v526, 0
        %v546 = vsel %vm538, %v527, 0
        %548 = vmatprep.subr.bf16.mxu0 %v520
        %549 = vmatpush1.bf16.msra.mxu0 %v519
        %550 = vmatprep.subr.bf16.mxu0 %v523
        %551 = vmatpush1.bf16.msra.mxu0 %v522
        %552 = vmatprep.subr.bf16.mxu0 %v543
        %553 = vmatpush1.bf16.msra.mxu0 %v540
        %554 = vmatprep.subr.bf16.mxu0 0
        %555 = vmatpush1.bf16.msra.mxu0 0
        %556 = vmatprep.subr.bf16.mxu0 0
        %557 = vmatpush1.bf16.msra.mxu0 0
        %558 = vmatprep.subr.bf16.mxu0 0
        %559 = vmatpush1.bf16.msra.mxu0 0
        %560 = vmatprep.subr.bf16.mxu0 0
        %561 = vmatpush1.bf16.msra.mxu0 0
        %562 = vmatprep.subr.bf16.mxu0 0
        %563 = vmatpush1.bf16.msra.mxu0 0
        %564 = vmatprep.subr.bf16.mxu0 0
        %565 = vmatpush1.bf16.msra.mxu0 0
        %566 = vmatprep.subr.bf16.mxu0 0
        %567 = vmatpush1.bf16.msra.mxu0 0
        %568 = vmatprep.subr.bf16.mxu0 0
        %569 = vmatpush1.bf16.msra.mxu0 0
        %570 = vmatprep.subr.bf16.mxu0 0
        %571 = vmatpush1.bf16.msra.mxu0 0
        %572 = vmatprep.subr.bf16.mxu0 0
        %573 = vmatpush1.bf16.msra.mxu0 0
        %574 = vmatprep.subr.bf16.mxu0 0
        %575 = vmatpush1.bf16.msra.mxu0 0
        %576 = vmatprep.subr.bf16.mxu0 0
        %577 = vmatpush1.bf16.msra.mxu0 0
        %578 = vmatprep.subr.bf16.mxu0 0
        %579 = vmatpush1.bf16.msra.mxu0 0
        %580 = vmatprep.mubr.bf16.mxu0 0
        %581 = vmatmul.mubr.bf16.gmra.mrb[0].mxu0 %v536
        %v582 = vpop.f32.mrb[0].mxu0
        %v583 = vadd.f32 0.0, %v582
        %v584 = vpop.f32.mrb[0].mxu0
        %v585 = vadd.f32 0.0, %v584
        %v586 = vpop.f32.mrb[0].mxu0
        %v587 = vpop.f32.mrb[0].mxu0
        %588 = vdwg.mxu0
        %589 = vmatprep.subr.bf16.mxu0 0
        %590 = vmatpush1.bf16.msra.mxu0 %v521
        %591 = vmatprep.subr.bf16.mxu0 0
        %592 = vmatpush1.bf16.msra.mxu0 %v524
        %593 = vmatprep.subr.bf16.mxu0 0
        %594 = vmatpush1.bf16.msra.mxu0 %v546
        %595 = vmatprep.subr.bf16.mxu0 0
        %596 = vmatpush1.bf16.msra.mxu0 0
        %597 = vmatprep.subr.bf16.mxu0 0
        %598 = vmatpush1.bf16.msra.mxu0 0
        %599 = vmatprep.subr.bf16.mxu0 0
        %600 = vmatpush1.bf16.msra.mxu0 0
        %601 = vmatprep.subr.bf16.mxu0 0
        %602 = vmatpush1.bf16.msra.mxu0 0
        %603 = vmatprep.subr.bf16.mxu0 0
        %604 = vmatpush1.bf16.msra.mxu0 0
        %605 = vmatprep.subr.bf16.mxu0 0
        %606 = vmatpush1.bf16.msra.mxu0 0
        %607 = vmatprep.subr.bf16.mxu0 0
        %608 = vmatpush1.bf16.msra.mxu0 0
        %609 = vmatprep.subr.bf16.mxu0 0
        %610 = vmatpush1.bf16.msra.mxu0 0
        %611 = vmatprep.subr.bf16.mxu0 0
        %612 = vmatpush1.bf16.msra.mxu0 0
        %613 = vmatprep.subr.bf16.mxu0 0
        %614 = vmatpush1.bf16.msra.mxu0 0
        %615 = vmatprep.subr.bf16.mxu0 0
        %616 = vmatpush1.bf16.msra.mxu0 0
        %617 = vmatprep.subr.bf16.mxu0 0
        %618 = vmatpush1.bf16.msra.mxu0 0
        %619 = vmatprep.subr.bf16.mxu0 0
        %620 = vmatpush1.bf16.msra.mxu0 0
        %621 = vmatprep.mubr.bf16.mxu0 0
        %622 = vmatmul.mubr.bf16.gmra.mrb[0].mxu0 %v536
        %v623 = vpop.f32.mrb[0].mxu0
        %v624 = vadd.f32 0.0, %v623
        %v625 = vpop.f32.mrb[0].mxu0
        %v626 = vpop.f32.mrb[0].mxu0
        %v627 = vpop.f32.mrb[0].mxu0
        %628 = vdwg.mxu0
        %v629 = vld [vmem:[#allocation8] sm:$0xff]
        %631 = vset.pattern.permute.xlu0 0
        %632 = vperm.xlu0 %631, %v629
        %v633 = vpop.permute.xlu0 %632
        %v635 = vmul.f32 %v583, %v633
        %v636 = vmul.f32 %v585, %v633
        %v637 = vmul.f32 %v624, %v633
        %638 = vset.pattern.permute.xlu0 1
        %639 = vperm.xlu0 %638, %v629
        %v640 = vpop.permute.xlu0 %639
        %v642 = vadd.f32 %v635, %v640
        %v643 = vadd.f32 %v636, %v640
        %v644 = vadd.f32 %v637, %v640
        %vm645 = vcmp.ge.f32.partialorder %v642, 0.0
        %vm646 = vcmp.ge.f32.partialorder %v643, 0.0
        %vm647 = vcmp.ge.f32.partialorder %v644, 0.0
        %648 = vset.pattern.permute.xlu0 2
        %649 = vperm.xlu0 %648, %v629
        %v650 = vpop.permute.xlu0 %649
        %v652 = vmul.f32 %v650, %v642
        %v653 = vmul.f32 %v650, %v643
        %v654 = vmul.f32 %v650, %v644
        %v655 = vsel %vm645, %v642, %v652
        %v656 = vsel %vm646, %v643, %v653
        %v657 = vsel %vm647, %v644, %v654
        %vm658 = vcmask 130048
        %659 = vst.msk [vmem:[%s211] sm:$0xff] %vm658, %v655
        %661 = vrot.lane.b32.xlu0 %v655, 126
        %v662 = vpop.permute.xlu0 %661
        %vm664 = vcmask 261248
        %665 = vst.msk [vmem:[%s211] sm:$0xff] %vm664, %v662
        %666 = vrot.lane.b32.xlu0 %v655, 124
        %v667 = vpop.permute.xlu0 %666
        %vm669 = vcmask 392448
        %670 = vst.msk [vmem:[%s211] sm:$0xff] %vm669, %v667
        %671 = vrot.lane.b32.xlu0 %v655, 122
        %v672 = vpop.permute.xlu0 %671
        %vm674 = vcmask 523648
        %675 = vst.msk [vmem:[%s211] sm:$0xff] %vm674, %v672
        %676 = vrot.lane.b32.xlu0 %v655, 120
        %v677 = vpop.permute.xlu0 %676
        %vm679 = vcmask 654848
        %680 = vst.msk [vmem:[%s211] sm:$0xff] %vm679, %v677
        %681 = vrot.lane.b32.xlu0 %v655, 118
        %v682 = vpop.permute.xlu0 %681
        %vm684 = vcmask 786048
        %685 = vst.msk [vmem:[%s211] sm:$0xff] %vm684, %v682
        %686 = vrot.lane.b32.xlu0 %v655, 116
        %v687 = vpop.permute.xlu0 %686
        %vm689 = vcmask 917248
        %690 = vst.msk [vmem:[%s211] sm:$0xff] %vm689, %v687
        %692 = vrot.lane.b32.xlu0 %v655, 114
        %v693 = vpop.permute.xlu0 %692
        %694 = vrot.lane.b32.xlu0 %v656, 114
        %v695 = vpop.permute.xlu0 %694
        %vm696 = vcmask 932864
        %v697 = vsel %vm696, %v693, %v695
        %vm699 = vcmask 1048448
        %700 = vst.msk [vmem:[%s211] sm:$0xff] %vm699, %v697
        %701 = vrot.lane.b32.xlu0 %v656, 112
        %v702 = vpop.permute.xlu0 %701
        %704 = vst.msk [vmem:[%s211 + $0x8] sm:$0xff] %vm658, %v702
        %705 = vrot.lane.b32.xlu0 %v656, 110
        %v706 = vpop.permute.xlu0 %705
        %708 = vst.msk [vmem:[%s211 + $0x8] sm:$0xff] %vm664, %v706
        %709 = vrot.lane.b32.xlu0 %v656, 108
        %v710 = vpop.permute.xlu0 %709
        %712 = vst.msk [vmem:[%s211 + $0x8] sm:$0xff] %vm669, %v710
        %713 = vrot.lane.b32.xlu0 %v656, 106
        %v714 = vpop.permute.xlu0 %713
        %716 = vst.msk [vmem:[%s211 + $0x8] sm:$0xff] %vm674, %v714
        %717 = vrot.lane.b32.xlu0 %v656, 104
        %v718 = vpop.permute.xlu0 %717
        %720 = vst.msk [vmem:[%s211 + $0x8] sm:$0xff] %vm679, %v718
        %721 = vrot.lane.b32.xlu0 %v656, 102
        %v722 = vpop.permute.xlu0 %721
        %724 = vst.msk [vmem:[%s211 + $0x8] sm:$0xff] %vm684, %v722
        %726 = vrot.lane.b32.xlu0 %v656, 100
        %v727 = vpop.permute.xlu0 %726
        %728 = vrot.lane.b32.xlu0 %v657, 100
        %v729 = vpop.permute.xlu0 %728
        %vm730 = vcmask 818176
        %v731 = vsel %vm730, %v727, %v729
        %733 = vst.msk [vmem:[%s211 + $0x8] sm:$0xff] %vm689, %v731
        %734 = vrot.lane.b32.xlu0 %v657, 98
        %v735 = vpop.permute.xlu0 %734
        %737 = vst.msk [vmem:[%s211 + $0x8] sm:$0xff] %vm699, %v735
        %s738 = sand.u32 %s97, 1
        %s739 = scalar_lea.sflag [#allocation5], %s738
        %s740 = sand.u32 %s97, 1
        %s741 = smul.addr %s740, 16
        %s742 = scalar_lea.vmem [#allocation9], %s741
        // Predicated region
        $region45: #{conv_block_forward.3} parent=31 // pred_check
          %p743 = pneg %p107
        $region46: #{conv_block_forward.3} parent=31 // pred_check_branch
          %745 = sbr.rel (%p743) target = $region48
        $region47: #{conv_block_forward.3} parent=31 // pred_region
          %s747 = ssub.s32 256, 256
          %748 = vsyncadd %s739, %s747
          %s749 = smul.addr %s21, 2
          %s750 = smul.addr %s749, 128
          %s751 = scalar_lea.hbm %s3, %s750
          %s753 = sshll.u32 %s742, 4
          %s754 = int_to_ptr.vmem [resolvable:$true] %s753
          %756 = dma.vmem_to_hbm [thread:$0]  %s754, 256, %s751, %s739
        $region48: #{conv_block_forward.3} parent=31 // pred_fallthru
          _
      $region32: #{conv_block_forward.3} parent=5 // pred_fallthru
        _
      %p757 = scmp.le.s32.totalorder 2, %s16
      // Predicated region
      $region49: #{conv_block_forward.3} parent=5 // pred_check
        %p758 = pneg %p757
      $region50: #{conv_block_forward.3} parent=5 // pred_check_branch
        %760 = sbr.rel (%p758) target = $region52
      $region51: #{conv_block_forward.3} parent=5 // pred_region
        %s761 = ssub.s32 %s16, 2
        // Predicated region
        $region53: #{conv_block_forward.3} parent=51 // pred_check
          %p762 = pneg %p113
        $region54: #{conv_block_forward.3} parent=51 // pred_check_branch
          %764 = sbr.rel (%p762) target = $region56
        $region55: #{conv_block_forward.3} parent=51 // pred_region
          %s765 = sand.u32 %s98, 1
          %s766 = scalar_lea.sflag [#allocation5], %s765
          %s767 = sand.u32 %s98, 1
          %s768 = smul.addr %s767, 16
          %s769 = scalar_lea.vmem [#allocation9], %s768
          %770 = dma.done %s766, 256
        $region56: #{conv_block_forward.3} parent=51 // pred_fallthru
          _
      $region52: #{conv_block_forward.3} parent=5 // pred_fallthru
        _
    $region6: #{conv_block_forward.3} parent=1 // loop_footer
      %s20 = sadd.s32 1, %s16
    $region7: #{conv_block_forward.3} parent=1 // loop_footer_branch
      %15 = sbr.rel target = $region3
    $region8: #{conv_block_forward.3} parent=1 // loop_exit
      _
    %771 = vsyncpa [#allocation4], 1
    %s772 = scalar_lea.sflag [#allocation4], 1
    %773 = vsyncpa %s772, 1
    %774 = vsyncpa [#allocation7], 1
    %775 = vsyncpa [#allocation5], 1
    %s776 = scalar_lea.sflag [#allocation5], 1
    %777 = vsyncpa %s776, 1

</llo_original>
